<compile_context>
chip_gen: v7x
topology: tpu7x:2x2x1
jax: 0.10.0
libtpu: 0.0.40
codegen_flags: <defaults>
</compile_context>

<pallas_src>
import math

import jax
import jax.numpy as jnp
from jax.experimental import pallas as pl
from jax.experimental.pallas import tpu as pltpu


def _round_up(x, m):
    return ((x + m - 1) // m) * m


def _make_mixprop_kernel(gdep, nb, c_in):
    """Kernel closed over static gdep / per-tile batch Nb / C_in."""

    def kernel(x_ref, a_ref, w_ref, b_ref, o_ref, acc_ref):
        a = a_ref[...]                                   # (Vp, Vp)  bf16, resident
        h = x_ref[...]                                   # (Vp, Nb*C) bf16, hop 0
        vp = a.shape[0]

        # Bias folded into the accumulator init (f32 accumulate).
        acc_ref[...] = jnp.broadcast_to(b_ref[...], acc_ref.shape)

        for k in range(gdep + 1):
            if k > 0:
                # Mix-hop propagation for ALL batches of this tile at once:
                # (Vp, Vp) @ (Vp, Nb*C), bf16 operands, f32 accumulation.
                h = jnp.dot(a, h, preferred_element_type=jnp.float32
                            ).astype(jnp.bfloat16)

            # One relayout per hop (instead of N masked column slice-stores):
            # fold-by-lane (Vp, Nb*C) -> rows (Nb*Vp, C) via static lane slices
            # concatenated along the sublane axis.
            h_rows = jnp.concatenate(
                [h[:, n * c_in:(n + 1) * c_in] for n in range(nb)], axis=0)

            # Accumulated per-hop MLP dot: (Nb*Vp, C) @ (C, Cop), f32 accumulate.
            w_k = w_ref[k * c_in:(k + 1) * c_in, :]      # static sublane slice
            acc_ref[...] += jnp.dot(h_rows, w_k,
                                    preferred_element_type=jnp.float32)

        o_ref[...] = acc_ref[...].astype(o_ref.dtype)

    return kernel


def mixprop_pallas(x, adj, w_mlp, b_mlp, gdep):
    """x: (N, V, C_in), adj: (V, V), w_mlp: (C_out, (gdep+1)*C_in), b_mlp: (C_out,)."""
    N, V, C = x.shape
    C_out, Kc = w_mlp.shape
    assert Kc == (gdep + 1) * C

    # ---------------- padding / tiling decisions (all static) ----------------
    Vp = _round_up(V, 128)            # MXU contraction dim for the propagation dot
    Cop = _round_up(C_out, 128)       # lane-dense output stores

    # Batch tile Nb: folded lane width Nb*C should be a multiple of 128 and
    # ideally ~256; pad the batch up to a multiple of Nb.
    q = 128 // math.gcd(C, 128)       # min #batches giving a 128-multiple lane width
    if q > 16:                        # pathological C: fall back to one full tile
        Nb = Np = max(N, 1)
    else:
        nb_256 = _round_up(-(-256 // C), q)
        n_q = _round_up(N, q)
        Nb = min(nb_256, n_q)
        Np = _round_up(N, Nb)
    grid = (Np // Nb,)

    # ---------------- one-time wrapper preprocessing (plain JAX) -------------
    # Row-normalise BEFORE padding (rows of adj summing to 0 give NaN, matching
    # the PyTorch module; zero-padded rows/cols stay zero -> no spurious NaNs).
    a_norm = adj / jnp.sum(adj, axis=1, keepdims=True)
    a_p = jnp.pad(a_norm, ((0, Vp - V), (0, Vp - V))).astype(jnp.bfloat16)

    # Propagation layout with batch folded into lanes: x2[v, n*C + c] = x[n, v, c].
    x_p = jnp.pad(x, ((0, Np - N), (0, Vp - V), (0, 0)))
    x2 = jnp.transpose(x_p, (1, 0, 2)).reshape(Vp, Np * C).astype(jnp.bfloat16)

    # Pre-transposed MLP weight, output channels zero-padded to Cop.
    w_t = jnp.pad(jnp.transpose(w_mlp), ((0, 0), (0, Cop - C_out))).astype(jnp.bfloat16)
    b2d = jnp.pad(b_mlp, (0, Cop - C_out)).reshape(1, Cop).astype(jnp.float32)

    out_itemsize = jnp.dtype(x.dtype).itemsize
    vmem_bytes = (
        2 * Vp * Nb * C * 2            # x tile, double-buffered, bf16
        + 2 * Vp * Vp * 2              # adjacency (resident)
        + 2 * Kc * Cop * 2             # MLP weight (resident)
        + 2 * 8 * Cop * 4              # bias tile
        + 2 * Nb * Vp * Cop * out_itemsize   # out tile, double-buffered
        + Nb * Vp * Cop * 4            # f32 accumulator scratch
    )
    vmem_limit = int(min(max(2 * vmem_bytes, 16 << 20), 64 << 20))

    out_flat = pl.pallas_call(
        _make_mixprop_kernel(gdep, Nb, C),
        out_shape=jax.ShapeDtypeStruct((Np * Vp, Cop), x.dtype),
        grid_spec=pltpu.PrefetchScalarGridSpec(
            num_scalar_prefetch=0,
            grid=grid,                                       # batch tiles (streamed)
            in_specs=[
                pl.BlockSpec((Vp, Nb * C), lambda i: (0, i)),    # x tile (streamed)
                pl.BlockSpec((Vp, Vp), lambda i: (0, 0)),        # adjacency (resident)
                pl.BlockSpec((Kc, Cop), lambda i: (0, 0)),       # W.T (resident)
                pl.BlockSpec((1, Cop), lambda i: (0, 0)),        # bias (resident)
            ],
            out_specs=pl.BlockSpec((Nb * Vp, Cop), lambda i: (i, 0)),
            scratch_shapes=[pltpu.VMEM((Nb * Vp, Cop), jnp.float32)],
        ),
        compiler_params=pltpu.CompilerParams(
            dimension_semantics=("parallel",),               # batch tiles independent
            vmem_limit_bytes=vmem_limit),
    )(x2, a_p, w_t, b2d)

    # Free layout plumbing: unfold rows and strip the V / batch / channel padding.
    return out_flat.reshape(Np, Vp, Cop)[:N, :V, :C_out]


def mixprop_reference(x, adj, w_mlp, b_mlp, gdep):
    """Plain-JAX f32 reference mirroring the PyTorch forward (dropout=identity)."""
    d = adj.sum(axis=1)
    a = adj / d[:, None]
    h = x
    outs = [h]
    for _ in range(gdep):
        h = jnp.einsum('nwl,vw->nvl', h, a)
        outs.append(h)
    ho = jnp.concatenate(outs, axis=2)
    return jnp.einsum('nvk,ok->nvo', ho, w_mlp) + b_mlp


if __name__ == "__main__":
    # Module hyperparameters
    c_in, c_out, gdep = 32, 32, 2
    N, V = 2, 16   # batch, number of graph nodes

    key = jax.random.PRNGKey(0)
    kx, ka, kw, kb = jax.random.split(key, 4)

    x = jax.random.normal(kx, (N, V, c_in), dtype=jnp.float32)
    # strictly positive adjacency so the row-sum normalization is well defined
    adj = jax.random.uniform(ka, (V, V), dtype=jnp.float32, minval=0.1, maxval=1.0)

    fan_in = (gdep + 1) * c_in
    bound = 1.0 / (fan_in ** 0.5)
    w_mlp = jax.random.uniform(kw, (c_out, fan_in), dtype=jnp.float32,
                               minval=-bound, maxval=bound)
    b_mlp = jax.random.uniform(kb, (c_out,), dtype=jnp.float32,
                               minval=-bound, maxval=bound)

    out = mixprop_pallas(x, adj, w_mlp, b_mlp, gdep)
    out = jax.block_until_ready(out)

    ref = mixprop_reference(x, adj, w_mlp, b_mlp, gdep)
    assert out.shape == (N, V, c_out)
    # bf16 MXU operands (f32 accumulation) -> loosened tolerance vs the f32 reference.
    assert jnp.allclose(out, ref, atol=5e-2, rtol=5e-2), (
        f"mismatch vs reference, max abs err = {jnp.max(jnp.abs(out - ref))}")

    print("KERNEL_OK")
</pallas_src>

<mosaic_0001>
module attributes {stable_mosaic.version = 11 : i64} {
  func.func @kernel(%arg0: i32, %arg1: memref<128x128xbf16, #tpu.memory_space<vmem>>, %arg2: memref<128x128xbf16, #tpu.memory_space<vmem>>, %arg3: memref<96x128xbf16, #tpu.memory_space<vmem>>, %arg4: memref<1x128xf32, #tpu.memory_space<vmem>>, %arg5: memref<512x128xf32, #tpu.memory_space<vmem>>, %arg6: memref<512x128xf32, #tpu.memory_space<vmem>>) attributes {dimension_semantics = [#tpu.dimension_semantics<parallel>], iteration_bounds = array<i64: 1>, scalar_prefetch = 0 : i64, scratch_operands = 1 : i64, tpu.core_type = #tpu.core_type<tc>, window_params = [{transform_indices = @transform_0, window_bounds = array<i64: 128, 128>}, {pipeline_mode = #tpu.pipeline_mode<synchronous>, transform_indices = @transform_1, window_bounds = array<i64: 128, 128>}, {pipeline_mode = #tpu.pipeline_mode<synchronous>, transform_indices = @transform_2, window_bounds = array<i64: 96, 128>}, {pipeline_mode = #tpu.pipeline_mode<synchronous>, transform_indices = @transform_3, window_bounds = array<i64: 1, 128>}, {transform_indices = @transform_4, window_bounds = array<i64: 512, 128>}]} {
    %c0 = arith.constant 0 : index
    %c0_0 = arith.constant 0 : index
    %0 = vector.load %arg2[%c0, %c0_0] : memref<128x128xbf16, #tpu.memory_space<vmem>>, vector<128x128xbf16>
    %c0_1 = arith.constant 0 : index
    %c0_2 = arith.constant 0 : index
    %1 = vector.load %arg1[%c0_1, %c0_2] : memref<128x128xbf16, #tpu.memory_space<vmem>>, vector<128x128xbf16>
    %c0_3 = arith.constant 0 : index
    %c0_4 = arith.constant 0 : index
    %2 = vector.load %arg4[%c0_3, %c0_4] : memref<1x128xf32, #tpu.memory_space<vmem>>, vector<1x128xf32>
    %3 = vector.shape_cast %2 : vector<1x128xf32> to vector<1x128xf32>
    %4 = vector.broadcast %3 : vector<1x128xf32> to vector<512x128xf32>
    %c0_5 = arith.constant 0 : index
    %c0_6 = arith.constant 0 : index
    %5 = vector.load %arg6[%c0_5, %c0_6] : memref<512x128xf32, #tpu.memory_space<vmem>>, vector<512x128xf32>
    tpu.vector_store %arg6[%c0_5, %c0_6], %4 {strides = array<i32>} : memref<512x128xf32, #tpu.memory_space<vmem>>, vector<512x128xf32>,
    %6 = vector.extract_strided_slice %1 {offsets = [0, 0], sizes = [128, 32], strides = [1, 1]} : vector<128x128xbf16> to vector<128x32xbf16>
    %7 = vector.extract_strided_slice %1 {offsets = [0, 32], sizes = [128, 32], strides = [1, 1]} : vector<128x128xbf16> to vector<128x32xbf16>
    %8 = vector.extract_strided_slice %1 {offsets = [0, 64], sizes = [128, 32], strides = [1, 1]} : vector<128x128xbf16> to vector<128x32xbf16>
    %9 = vector.extract_strided_slice %1 {offsets = [0, 96], sizes = [128, 32], strides = [1, 1]} : vector<128x128xbf16> to vector<128x32xbf16>
    %10 = tpu.concatenate %6, %7, %8, %9 in 0 : vector<128x32xbf16>, vector<128x32xbf16>, vector<128x32xbf16>, vector<128x32xbf16> -> vector<512x32xbf16>
    %c0_7 = arith.constant 0 : index
    %c0_8 = arith.constant 0 : index
    %11 = vector.load %arg3[%c0_7, %c0_8] : memref<96x128xbf16, #tpu.memory_space<vmem>>, vector<32x128xbf16>
    %c0_9 = arith.constant 0 : index
    %c0_10 = arith.constant 0 : index
    %12 = vector.load %arg6[%c0_9, %c0_10] : memref<512x128xf32, #tpu.memory_space<vmem>>, vector<512x128xf32>
    %cst = arith.constant dense<0.000000e+00> : vector<512x128xf32>
    %13 = tpu.matmul %10, %11, %cst {dimension_numbers = #tpu.dot_dimension_numbers<[1], [0], [0], [1], [0, 0, 1, 1], [], []>} : vector<512x32xbf16>, vector<32x128xbf16>, vector<512x128xf32> -> vector<512x128xf32>
    %14 = arith.addf %12, %13 : vector<512x128xf32>
    %c0_11 = arith.constant 0 : index
    %c0_12 = arith.constant 0 : index
    %15 = vector.load %arg6[%c0_11, %c0_12] : memref<512x128xf32, #tpu.memory_space<vmem>>, vector<512x128xf32>
    tpu.vector_store %arg6[%c0_11, %c0_12], %14 {strides = array<i32>} : memref<512x128xf32, #tpu.memory_space<vmem>>, vector<512x128xf32>,
    %cst_13 = arith.constant dense<0.000000e+00> : vector<128x128xf32>
    %16 = tpu.matmul %0, %1, %cst_13 {dimension_numbers = #tpu.dot_dimension_numbers<[1], [0], [0], [1], [0, 0, 1, 1], [], []>} : vector<128x128xbf16>, vector<128x128xbf16>, vector<128x128xf32> -> vector<128x128xf32>
    %17 = arith.truncf %16 : vector<128x128xf32> to vector<128x128xbf16>
    %18 = vector.extract_strided_slice %17 {offsets = [0, 0], sizes = [128, 32], strides = [1, 1]} : vector<128x128xbf16> to vector<128x32xbf16>
    %19 = vector.extract_strided_slice %17 {offsets = [0, 32], sizes = [128, 32], strides = [1, 1]} : vector<128x128xbf16> to vector<128x32xbf16>
    %20 = vector.extract_strided_slice %17 {offsets = [0, 64], sizes = [128, 32], strides = [1, 1]} : vector<128x128xbf16> to vector<128x32xbf16>
    %21 = vector.extract_strided_slice %17 {offsets = [0, 96], sizes = [128, 32], strides = [1, 1]} : vector<128x128xbf16> to vector<128x32xbf16>
    %22 = tpu.concatenate %18, %19, %20, %21 in 0 : vector<128x32xbf16>, vector<128x32xbf16>, vector<128x32xbf16>, vector<128x32xbf16> -> vector<512x32xbf16>
    %c32 = arith.constant 32 : index
    %c0_14 = arith.constant 0 : index
    %23 = vector.load %arg3[%c32, %c0_14] : memref<96x128xbf16, #tpu.memory_space<vmem>>, vector<32x128xbf16>
    %c0_15 = arith.constant 0 : index
    %c0_16 = arith.constant 0 : index
    %24 = vector.load %arg6[%c0_15, %c0_16] : memref<512x128xf32, #tpu.memory_space<vmem>>, vector<512x128xf32>
    %cst_17 = arith.constant dense<0.000000e+00> : vector<512x128xf32>
    %25 = tpu.matmul %22, %23, %cst_17 {dimension_numbers = #tpu.dot_dimension_numbers<[1], [0], [0], [1], [0, 0, 1, 1], [], []>} : vector<512x32xbf16>, vector<32x128xbf16>, vector<512x128xf32> -> vector<512x128xf32>
    %26 = arith.addf %24, %25 : vector<512x128xf32>
    %c0_18 = arith.constant 0 : index
    %c0_19 = arith.constant 0 : index
    %27 = vector.load %arg6[%c0_18, %c0_19] : memref<512x128xf32, #tpu.memory_space<vmem>>, vector<512x128xf32>
    tpu.vector_store %arg6[%c0_18, %c0_19], %26 {strides = array<i32>} : memref<512x128xf32, #tpu.memory_space<vmem>>, vector<512x128xf32>,
    %cst_20 = arith.constant dense<0.000000e+00> : vector<128x128xf32>
    %28 = tpu.matmul %0, %17, %cst_20 {dimension_numbers = #tpu.dot_dimension_numbers<[1], [0], [0], [1], [0, 0, 1, 1], [], []>} : vector<128x128xbf16>, vector<128x128xbf16>, vector<128x128xf32> -> vector<128x128xf32>
    %29 = arith.truncf %28 : vector<128x128xf32> to vector<128x128xbf16>
    %30 = vector.extract_strided_slice %29 {offsets = [0, 0], sizes = [128, 32], strides = [1, 1]} : vector<128x128xbf16> to vector<128x32xbf16>
    %31 = vector.extract_strided_slice %29 {offsets = [0, 32], sizes = [128, 32], strides = [1, 1]} : vector<128x128xbf16> to vector<128x32xbf16>
    %32 = vector.extract_strided_slice %29 {offsets = [0, 64], sizes = [128, 32], strides = [1, 1]} : vector<128x128xbf16> to vector<128x32xbf16>
    %33 = vector.extract_strided_slice %29 {offsets = [0, 96], sizes = [128, 32], strides = [1, 1]} : vector<128x128xbf16> to vector<128x32xbf16>
    %34 = tpu.concatenate %30, %31, %32, %33 in 0 : vector<128x32xbf16>, vector<128x32xbf16>, vector<128x32xbf16>, vector<128x32xbf16> -> vector<512x32xbf16>
    %c64 = arith.constant 64 : index
    %c0_21 = arith.constant 0 : index
    %35 = vector.load %arg3[%c64, %c0_21] : memref<96x128xbf16, #tpu.memory_space<vmem>>, vector<32x128xbf16>
    %c0_22 = arith.constant 0 : index
    %c0_23 = arith.constant 0 : index
    %36 = vector.load %arg6[%c0_22, %c0_23] : memref<512x128xf32, #tpu.memory_space<vmem>>, vector<512x128xf32>
    %cst_24 = arith.constant dense<0.000000e+00> : vector<512x128xf32>
    %37 = tpu.matmul %34, %35, %cst_24 {dimension_numbers = #tpu.dot_dimension_numbers<[1], [0], [0], [1], [0, 0, 1, 1], [], []>} : vector<512x32xbf16>, vector<32x128xbf16>, vector<512x128xf32> -> vector<512x128xf32>
    %38 = arith.addf %36, %37 : vector<512x128xf32>
    %c0_25 = arith.constant 0 : index
    %c0_26 = arith.constant 0 : index
    %39 = vector.load %arg6[%c0_25, %c0_26] : memref<512x128xf32, #tpu.memory_space<vmem>>, vector<512x128xf32>
    tpu.vector_store %arg6[%c0_25, %c0_26], %38 {strides = array<i32>} : memref<512x128xf32, #tpu.memory_space<vmem>>, vector<512x128xf32>,
    %c0_27 = arith.constant 0 : index
    %c0_28 = arith.constant 0 : index
    %40 = vector.load %arg6[%c0_27, %c0_28] : memref<512x128xf32, #tpu.memory_space<vmem>>, vector<512x128xf32>
    %c0_29 = arith.constant 0 : index
    %c0_30 = arith.constant 0 : index
    %41 = vector.load %arg5[%c0_29, %c0_30] : memref<512x128xf32, #tpu.memory_space<vmem>>, vector<512x128xf32>
    tpu.vector_store %arg5[%c0_29, %c0_30], %40 {strides = array<i32>} : memref<512x128xf32, #tpu.memory_space<vmem>>, vector<512x128xf32>,
    return
  }
  func.func @transform_0(%arg0: i32) -> (i32, i32) {
    %c0_i32 = arith.constant 0 : i32
    %c0_i32_0 = arith.constant 0 : i32
    return %c0_i32, %arg0 : i32, i32
  }
  func.func @transform_1(%arg0: i32) -> (i32, i32) {
    %c0_i32 = arith.constant 0 : i32
    %c0_i32_0 = arith.constant 0 : i32
    %c0_i32_1 = arith.constant 0 : i32
    return %c0_i32, %c0_i32_0 : i32, i32
  }
  func.func @transform_2(%arg0: i32) -> (i32, i32) {
    %c0_i32 = arith.constant 0 : i32
    %c0_i32_0 = arith.constant 0 : i32
    %c0_i32_1 = arith.constant 0 : i32
    return %c0_i32, %c0_i32_0 : i32, i32
  }
  func.func @transform_3(%arg0: i32) -> (i32, i32) {
    %c0_i32 = arith.constant 0 : i32
    %c0_i32_0 = arith.constant 0 : i32
    %c0_i32_1 = arith.constant 0 : i32
    return %c0_i32, %c0_i32_0 : i32, i32
  }
  func.func @transform_4(%arg0: i32) -> (i32, i32) {
    %c0_i32 = arith.constant 0 : i32
    %c0_i32_0 = arith.constant 0 : i32
    return %arg0, %c0_i32 : i32, i32
  }
}

</mosaic_0001>

<llo_original>
// kernel: tpu_custom_call.1
$region0: #{tpu_custom_call.1}
  #allocation0 [shape = 'u32[]', space=smem, size = 0x4, offset = 0x4, fixed_abs, tag = 'smem constant byte address 0x4 - core index']
  #allocation1 [shape = 'u32[144,128]{1,0:T(1,128)}', space=vmem, size = 0x12000, scoped, tag = 'internal scratch']
  #allocation2 [shape = 'f32[512,128]{1,0:T(8,128)}', space=vmem, size = 0x40000, scoped, tag = 'scratch operand']
  %s0 = inlined_call_operand.hbm [shape: bf16[128,128], index: 0, kind: input, shape index: {}]
  %s1 = inlined_call_operand.hbm [shape: bf16[128,128], index: 1, kind: input, shape index: {}]
  %s2 = inlined_call_operand.hbm [shape: bf16[96,128], index: 2, kind: input, shape index: {}]
  %s3 = inlined_call_operand.vmem [shape: f32[1,128], index: 3, kind: input, shape index: {}]
  %s4 = inlined_call_operand.hbm [shape: f32[512,128], index: 4, kind: output, shape index: {}]
  %s5 = sld [smem:[#allocation0]]
  $region38: #{tpu_custom_call.1} parent=0
    _
  %s7 = ssub.s32 1, %s5
  %s8 = scalar_select 0, %s7, %s5
  $region1: #{tpu_custom_call.1} parent=0
    #allocation3 [shape = 'u8[32768]{0}', space=vmem, size = 0x8000, scoped, tag = 'input window, operand 0, single buffered']
    #allocation4 [shape = 's32[1]{0}', space=sflag, size = 0x4, scoped, tag = 'scoped memory for tpu_custom_call.1']
    #allocation5 [shape = 's32[1]{0}', space=sflag, size = 0x4, scoped, tag = 'scoped memory for tpu_custom_call.1']
    #allocation6 [shape = 'u8[32768]{0}', space=vmem, size = 0x8000, scoped, tag = 'input window, operand 1, single buffered']
    #allocation7 [shape = 's32[1]{0}', space=sflag, size = 0x4, scoped, tag = 'scoped memory for tpu_custom_call.1']
    #allocation8 [shape = 'u8[24576]{0}', space=vmem, size = 0x6000, scoped, tag = 'input window, operand 2, single buffered']
    #allocation9 [shape = 'u8[262144]{0}', space=vmem, size = 0x40000, scoped, tag = 'output window, operand 0, single buffered']
    %9 = vsyncpa [#allocation4], 0
    %10 = vsyncpa [#allocation7], 0
    %11 = vsyncpa [#allocation5], 0
    // Predicated region
    $region2: #{tpu_custom_call.1} parent=1 // pred_check
      _
    $region3: #{tpu_custom_call.1} parent=1 // pred_check_branch
      %13 = sbr.rel (0) target = $region5
    $region4: #{tpu_custom_call.1} parent=1 // pred_region
      %s15 = ssub.s32 1024, 1024
      %16 = vsyncadd [#allocation4], %s15
      %s17 = sshll.u32 [#allocation3], 4
      %s18 = int_to_ptr.vmem [resolvable:$true] %s17
      %23 = dma.hbm_to_vmem [thread:$0]  %s0, 1024, %s18, [#allocation4], 64, 64, 4
    $region5: #{tpu_custom_call.1} parent=1 // pred_fallthru
      _
    // Predicated region
    $region6: #{tpu_custom_call.1} parent=1 // pred_check
      _
    $region7: #{tpu_custom_call.1} parent=1 // pred_check_branch
      %25 = sbr.rel (0) target = $region9
    $region8: #{tpu_custom_call.1} parent=1 // pred_region
      %s27 = ssub.s32 1024, 1024
      %28 = vsyncadd [#allocation7], %s27
      %s29 = sshll.u32 [#allocation6], 4
      %s30 = int_to_ptr.vmem [resolvable:$true] %s29
      %35 = dma.hbm_to_vmem [thread:$0]  %s1, 1024, %s30, [#allocation7], 64, 64, 4
    $region9: #{tpu_custom_call.1} parent=1 // pred_fallthru
      _
    // Predicated region
    $region10: #{tpu_custom_call.1} parent=1 // pred_check
      _
    $region11: #{tpu_custom_call.1} parent=1 // pred_check_branch
      %37 = sbr.rel (0) target = $region13
    $region12: #{tpu_custom_call.1} parent=1 // pred_region
      %s39 = ssub.s32 768, 768
      %40 = vsyncadd [#allocation7], %s39
      %s41 = sshll.u32 [#allocation8], 4
      %s42 = int_to_ptr.vmem [resolvable:$true] %s41
      %47 = dma.hbm_to_vmem [thread:$0]  %s2, 768, %s42, [#allocation7], 64, 64, 4
    $region13: #{tpu_custom_call.1} parent=1 // pred_fallthru
      _
    // Predicated region
    $region14: #{tpu_custom_call.1} parent=1 // pred_check
      _
    $region15: #{tpu_custom_call.1} parent=1 // pred_check_branch
      %49 = sbr.rel (0) target = $region17
    $region16: #{tpu_custom_call.1} parent=1 // pred_region
      _
    $region17: #{tpu_custom_call.1} parent=1 // pred_fallthru
      _
    // Predicated region
    $region18: #{tpu_custom_call.1} parent=1 // pred_check
      _
    $region19: #{tpu_custom_call.1} parent=1 // pred_check_branch
      %51 = sbr.rel (0) target = $region21
    $region20: #{tpu_custom_call.1} parent=1 // pred_region
      %52 = dma.done [#allocation4], 1024
    $region21: #{tpu_custom_call.1} parent=1 // pred_fallthru
      _
    // Predicated region
    $region22: #{tpu_custom_call.1} parent=1 // pred_check
      _
    $region23: #{tpu_custom_call.1} parent=1 // pred_check_branch
      %54 = sbr.rel (0) target = $region25
    $region24: #{tpu_custom_call.1} parent=1 // pred_region
      %55 = dma.done [#allocation7], 1024
    $region25: #{tpu_custom_call.1} parent=1 // pred_fallthru
      _
    // Predicated region
    $region26: #{tpu_custom_call.1} parent=1 // pred_check
      _
    $region27: #{tpu_custom_call.1} parent=1 // pred_check_branch
      %57 = sbr.rel (0) target = $region29
    $region28: #{tpu_custom_call.1} parent=1 // pred_region
      %58 = dma.done [#allocation7], 768
    $region29: #{tpu_custom_call.1} parent=1 // pred_fallthru
      _
    %v60 = vld [vmem:[#allocation6] sm:$0xf]
    %v61 = vld [vmem:[#allocation6 + $0x4] sm:$0xf]
    %v62 = vld [vmem:[#allocation6 + $0x8] sm:$0xf]
    %v63 = vld [vmem:[#allocation6 + $0xc] sm:$0xf]
    %v64 = vld [vmem:[#allocation6 + $0x10] sm:$0xf]
    %v65 = vld [vmem:[#allocation6 + $0x14] sm:$0xf]
    %v66 = vld [vmem:[#allocation6 + $0x18] sm:$0xf]
    %v67 = vld [vmem:[#allocation6 + $0x1c] sm:$0xf]
    %v68 = vld [vmem:[#allocation6 + $0x20] sm:$0xf]
    %v69 = vld [vmem:[#allocation6 + $0x24] sm:$0xf]
    %v70 = vld [vmem:[#allocation6 + $0x28] sm:$0xf]
    %v71 = vld [vmem:[#allocation6 + $0x2c] sm:$0xf]
    %v72 = vld [vmem:[#allocation6 + $0x30] sm:$0xf]
    %v73 = vld [vmem:[#allocation6 + $0x34] sm:$0xf]
    %v74 = vld [vmem:[#allocation6 + $0x38] sm:$0xf]
    %v75 = vld [vmem:[#allocation6 + $0x3c] sm:$0xf]
    %v76 = vld [vmem:[#allocation3] sm:$0xf]
    %v77 = vld [vmem:[#allocation3 + $0x4] sm:$0xf]
    %v78 = vld [vmem:[#allocation3 + $0x8] sm:$0xf]
    %v79 = vld [vmem:[#allocation3 + $0xc] sm:$0xf]
    %v80 = vld [vmem:[#allocation3 + $0x10] sm:$0xf]
    %v81 = vld [vmem:[#allocation3 + $0x14] sm:$0xf]
    %v82 = vld [vmem:[#allocation3 + $0x18] sm:$0xf]
    %v83 = vld [vmem:[#allocation3 + $0x1c] sm:$0xf]
    %v84 = vld [vmem:[#allocation3 + $0x20] sm:$0xf]
    %v85 = vld [vmem:[#allocation3 + $0x24] sm:$0xf]
    %v86 = vld [vmem:[#allocation3 + $0x28] sm:$0xf]
    %v87 = vld [vmem:[#allocation3 + $0x2c] sm:$0xf]
    %v88 = vld [vmem:[#allocation3 + $0x30] sm:$0xf]
    %v89 = vld [vmem:[#allocation3 + $0x34] sm:$0xf]
    %v90 = vld [vmem:[#allocation3 + $0x38] sm:$0xf]
    %v91 = vld [vmem:[#allocation3 + $0x3c] sm:$0xf]
    %v92 = vld [vmem:[%s3] sm:$0x1]
    %v94 = vlaneseq
    %v95 = vshrl.u32 %v94, 7
    %v96 = vsub.s32 0, %v95
    %v97 = vrot.slane %v92, %v96
    %99 = vst [vmem:[#allocation2] sm:$0xff] %v97
    %100 = vst [vmem:[#allocation2 + $0x8] sm:$0xff] %v97
    %101 = vst [vmem:[#allocation2 + $0x10] sm:$0xff] %v97
    %102 = vst [vmem:[#allocation2 + $0x18] sm:$0xff] %v97
    %103 = vst [vmem:[#allocation2 + $0x20] sm:$0xff] %v97
    %104 = vst [vmem:[#allocation2 + $0x28] sm:$0xff] %v97
    %105 = vst [vmem:[#allocation2 + $0x30] sm:$0xff] %v97
    %106 = vst [vmem:[#allocation2 + $0x38] sm:$0xff] %v97
    %107 = vst [vmem:[#allocation2 + $0x40] sm:$0xff] %v97
    %108 = vst [vmem:[#allocation2 + $0x48] sm:$0xff] %v97
    %109 = vst [vmem:[#allocation2 + $0x50] sm:$0xff] %v97
    %110 = vst [vmem:[#allocation2 + $0x58] sm:$0xff] %v97
    %111 = vst [vmem:[#allocation2 + $0x60] sm:$0xff] %v97
    %112 = vst [vmem:[#allocation2 + $0x68] sm:$0xff] %v97
    %113 = vst [vmem:[#allocation2 + $0x70] sm:$0xff] %v97
    %114 = vst [vmem:[#allocation2 + $0x78] sm:$0xff] %v97
    %115 = vst [vmem:[#allocation2 + $0x80] sm:$0xff] %v97
    %116 = vst [vmem:[#allocation2 + $0x88] sm:$0xff] %v97
    %117 = vst [vmem:[#allocation2 + $0x90] sm:$0xff] %v97
    %118 = vst [vmem:[#allocation2 + $0x98] sm:$0xff] %v97
    %119 = vst [vmem:[#allocation2 + $0xa0] sm:$0xff] %v97
    %120 = vst [vmem:[#allocation2 + $0xa8] sm:$0xff] %v97
    %121 = vst [vmem:[#allocation2 + $0xb0] sm:$0xff] %v97
    %122 = vst [vmem:[#allocation2 + $0xb8] sm:$0xff] %v97
    %123 = vst [vmem:[#allocation2 + $0xc0] sm:$0xff] %v97
    %124 = vst [vmem:[#allocation2 + $0xc8] sm:$0xff] %v97
    %125 = vst [vmem:[#allocation2 + $0xd0] sm:$0xff] %v97
    %126 = vst [vmem:[#allocation2 + $0xd8] sm:$0xff] %v97
    %127 = vst [vmem:[#allocation2 + $0xe0] sm:$0xff] %v97
    %128 = vst [vmem:[#allocation2 + $0xe8] sm:$0xff] %v97
    %129 = vst [vmem:[#allocation2 + $0xf0] sm:$0xff] %v97
    %130 = vst [vmem:[#allocation2 + $0xf8] sm:$0xff] %v97
    %131 = vst [vmem:[#allocation2 + $0x100] sm:$0xff] %v97
    %132 = vst [vmem:[#allocation2 + $0x108] sm:$0xff] %v97
    %133 = vst [vmem:[#allocation2 + $0x110] sm:$0xff] %v97
    %134 = vst [vmem:[#allocation2 + $0x118] sm:$0xff] %v97
    %135 = vst [vmem:[#allocation2 + $0x120] sm:$0xff] %v97
    %136 = vst [vmem:[#allocation2 + $0x128] sm:$0xff] %v97
    %137 = vst [vmem:[#allocation2 + $0x130] sm:$0xff] %v97
    %138 = vst [vmem:[#allocation2 + $0x138] sm:$0xff] %v97
    %139 = vst [vmem:[#allocation2 + $0x140] sm:$0xff] %v97
    %140 = vst [vmem:[#allocation2 + $0x148] sm:$0xff] %v97
    %141 = vst [vmem:[#allocation2 + $0x150] sm:$0xff] %v97
    %142 = vst [vmem:[#allocation2 + $0x158] sm:$0xff] %v97
    %143 = vst [vmem:[#allocation2 + $0x160] sm:$0xff] %v97
    %144 = vst [vmem:[#allocation2 + $0x168] sm:$0xff] %v97
    %145 = vst [vmem:[#allocation2 + $0x170] sm:$0xff] %v97
    %146 = vst [vmem:[#allocation2 + $0x178] sm:$0xff] %v97
    %147 = vst [vmem:[#allocation2 + $0x180] sm:$0xff] %v97
    %148 = vst [vmem:[#allocation2 + $0x188] sm:$0xff] %v97
    %149 = vst [vmem:[#allocation2 + $0x190] sm:$0xff] %v97
    %150 = vst [vmem:[#allocation2 + $0x198] sm:$0xff] %v97
    %151 = vst [vmem:[#allocation2 + $0x1a0] sm:$0xff] %v97
    %152 = vst [vmem:[#allocation2 + $0x1a8] sm:$0xff] %v97
    %153 = vst [vmem:[#allocation2 + $0x1b0] sm:$0xff] %v97
    %154 = vst [vmem:[#allocation2 + $0x1b8] sm:$0xff] %v97
    %155 = vst [vmem:[#allocation2 + $0x1c0] sm:$0xff] %v97
    %156 = vst [vmem:[#allocation2 + $0x1c8] sm:$0xff] %v97
    %157 = vst [vmem:[#allocation2 + $0x1d0] sm:$0xff] %v97
    %158 = vst [vmem:[#allocation2 + $0x1d8] sm:$0xff] %v97
    %159 = vst [vmem:[#allocation2 + $0x1e0] sm:$0xff] %v97
    %160 = vst [vmem:[#allocation2 + $0x1e8] sm:$0xff] %v97
    %161 = vst [vmem:[#allocation2 + $0x1f0] sm:$0xff] %v97
    %162 = vst [vmem:[#allocation2 + $0x1f8] sm:$0xff] %v97
    %v179 = vunpack.c.l.b16 %v76
    %v180 = vunpack.c.l.b16 %v77
    %v181 = vunpack.c.l.b16 %v78
    %v182 = vunpack.c.l.b16 %v79
    %v183 = vunpack.c.l.b16 %v80
    %v184 = vunpack.c.l.b16 %v81
    %v185 = vunpack.c.l.b16 %v82
    %v186 = vunpack.c.l.b16 %v83
    %v187 = vunpack.c.l.b16 %v84
    %v188 = vunpack.c.l.b16 %v85
    %v189 = vunpack.c.l.b16 %v86
    %v190 = vunpack.c.l.b16 %v87
    %v191 = vunpack.c.l.b16 %v88
    %v192 = vunpack.c.l.b16 %v89
    %v193 = vunpack.c.l.b16 %v90
    %v194 = vunpack.c.l.b16 %v91
    %v195 = vpack.c.b16 %v180, %v179
    %v196 = vpack.c.b16 %v182, %v181
    %v197 = vpack.c.b16 %v184, %v183
    %v198 = vpack.c.b16 %v186, %v185
    %v199 = vpack.c.b16 %v188, %v187
    %v200 = vpack.c.b16 %v190, %v189
    %v201 = vpack.c.b16 %v192, %v191
    %v202 = vpack.c.b16 %v194, %v193
    %203 = vrot.lane.b32.xlu0 %v195, 96
    %v204 = vpop.permute.xlu0 %203
    %205 = vrot.lane.b32.xlu0 %v196, 96
    %v206 = vpop.permute.xlu0 %205
    %207 = vrot.lane.b32.xlu0 %v197, 96
    %v208 = vpop.permute.xlu0 %207
    %209 = vrot.lane.b32.xlu0 %v198, 96
    %v210 = vpop.permute.xlu0 %209
    %211 = vrot.lane.b32.xlu0 %v199, 96
    %v212 = vpop.permute.xlu0 %211
    %213 = vrot.lane.b32.xlu0 %v200, 96
    %v214 = vpop.permute.xlu0 %213
    %215 = vrot.lane.b32.xlu0 %v201, 96
    %v216 = vpop.permute.xlu0 %215
    %217 = vrot.lane.b32.xlu0 %v202, 96
    %v218 = vpop.permute.xlu0 %217
    %219 = vrot.lane.b32.xlu0 %v195, 64
    %v220 = vpop.permute.xlu0 %219
    %221 = vrot.lane.b32.xlu0 %v196, 64
    %v222 = vpop.permute.xlu0 %221
    %223 = vrot.lane.b32.xlu0 %v197, 64
    %v224 = vpop.permute.xlu0 %223
    %225 = vrot.lane.b32.xlu0 %v198, 64
    %v226 = vpop.permute.xlu0 %225
    %227 = vrot.lane.b32.xlu0 %v199, 64
    %v228 = vpop.permute.xlu0 %227
    %229 = vrot.lane.b32.xlu0 %v200, 64
    %v230 = vpop.permute.xlu0 %229
    %231 = vrot.lane.b32.xlu0 %v201, 64
    %v232 = vpop.permute.xlu0 %231
    %233 = vrot.lane.b32.xlu0 %v202, 64
    %v234 = vpop.permute.xlu0 %233
    %235 = vrot.lane.b32.xlu0 %v195, 32
    %v236 = vpop.permute.xlu0 %235
    %237 = vrot.lane.b32.xlu0 %v196, 32
    %v238 = vpop.permute.xlu0 %237
    %239 = vrot.lane.b32.xlu0 %v197, 32
    %v240 = vpop.permute.xlu0 %239
    %241 = vrot.lane.b32.xlu0 %v198, 32
    %v242 = vpop.permute.xlu0 %241
    %243 = vrot.lane.b32.xlu0 %v199, 32
    %v244 = vpop.permute.xlu0 %243
    %245 = vrot.lane.b32.xlu0 %v200, 32
    %v246 = vpop.permute.xlu0 %245
    %247 = vrot.lane.b32.xlu0 %v201, 32
    %v248 = vpop.permute.xlu0 %247
    %249 = vrot.lane.b32.xlu0 %v202, 32
    %v250 = vpop.permute.xlu0 %249
    %v251 = vld [vmem:[#allocation8] sm:$0xf]
    %v252 = vld [vmem:[#allocation8 + $0x4] sm:$0xf]
    %v253 = vld [vmem:[#allocation8 + $0x8] sm:$0xf]
    %v254 = vld [vmem:[#allocation8 + $0xc] sm:$0xf]
    %v255 = vld [vmem:[#allocation2] sm:$0xff]
    %v256 = vld [vmem:[#allocation2 + $0x8] sm:$0xff]
    %v257 = vld [vmem:[#allocation2 + $0x10] sm:$0xff]
    %v258 = vld [vmem:[#allocation2 + $0x18] sm:$0xff]
    %v259 = vld [vmem:[#allocation2 + $0x20] sm:$0xff]
    %v260 = vld [vmem:[#allocation2 + $0x28] sm:$0xff]
    %v261 = vld [vmem:[#allocation2 + $0x30] sm:$0xff]
    %v262 = vld [vmem:[#allocation2 + $0x38] sm:$0xff]
    %v263 = vld [vmem:[#allocation2 + $0x40] sm:$0xff]
    %v264 = vld [vmem:[#allocation2 + $0x48] sm:$0xff]
    %v265 = vld [vmem:[#allocation2 + $0x50] sm:$0xff]
    %v266 = vld [vmem:[#allocation2 + $0x58] sm:$0xff]
    %v267 = vld [vmem:[#allocation2 + $0x60] sm:$0xff]
    %v268 = vld [vmem:[#allocation2 + $0x68] sm:$0xff]
    %v269 = vld [vmem:[#allocation2 + $0x70] sm:$0xff]
    %v270 = vld [vmem:[#allocation2 + $0x78] sm:$0xff]
    %v271 = vld [vmem:[#allocation2 + $0x80] sm:$0xff]
    %v272 = vld [vmem:[#allocation2 + $0x88] sm:$0xff]
    %v273 = vld [vmem:[#allocation2 + $0x90] sm:$0xff]
    %v274 = vld [vmem:[#allocation2 + $0x98] sm:$0xff]
    %v275 = vld [vmem:[#allocation2 + $0xa0] sm:$0xff]
    %v276 = vld [vmem:[#allocation2 + $0xa8] sm:$0xff]
    %v277 = vld [vmem:[#allocation2 + $0xb0] sm:$0xff]
    %v278 = vld [vmem:[#allocation2 + $0xb8] sm:$0xff]
    %v279 = vld [vmem:[#allocation2 + $0xc0] sm:$0xff]
    %v280 = vld [vmem:[#allocation2 + $0xc8] sm:$0xff]
    %v281 = vld [vmem:[#allocation2 + $0xd0] sm:$0xff]
    %v282 = vld [vmem:[#allocation2 + $0xd8] sm:$0xff]
    %v283 = vld [vmem:[#allocation2 + $0xe0] sm:$0xff]
    %v284 = vld [vmem:[#allocation2 + $0xe8] sm:$0xff]
    %v285 = vld [vmem:[#allocation2 + $0xf0] sm:$0xff]
    %v286 = vld [vmem:[#allocation2 + $0xf8] sm:$0xff]
    %v287 = vld [vmem:[#allocation2 + $0x100] sm:$0xff]
    %v288 = vld [vmem:[#allocation2 + $0x108] sm:$0xff]
    %v289 = vld [vmem:[#allocation2 + $0x110] sm:$0xff]
    %v290 = vld [vmem:[#allocation2 + $0x118] sm:$0xff]
    %v291 = vld [vmem:[#allocation2 + $0x120] sm:$0xff]
    %v292 = vld [vmem:[#allocation2 + $0x128] sm:$0xff]
    %v293 = vld [vmem:[#allocation2 + $0x130] sm:$0xff]
    %v294 = vld [vmem:[#allocation2 + $0x138] sm:$0xff]
    %v295 = vld [vmem:[#allocation2 + $0x140] sm:$0xff]
    %v296 = vld [vmem:[#allocation2 + $0x148] sm:$0xff]
    %v297 = vld [vmem:[#allocation2 + $0x150] sm:$0xff]
    %v298 = vld [vmem:[#allocation2 + $0x158] sm:$0xff]
    %v299 = vld [vmem:[#allocation2 + $0x160] sm:$0xff]
    %v300 = vld [vmem:[#allocation2 + $0x168] sm:$0xff]
    %v301 = vld [vmem:[#allocation2 + $0x170] sm:$0xff]
    %v302 = vld [vmem:[#allocation2 + $0x178] sm:$0xff]
    %v303 = vld [vmem:[#allocation2 + $0x180] sm:$0xff]
    %v304 = vld [vmem:[#allocation2 + $0x188] sm:$0xff]
    %v305 = vld [vmem:[#allocation2 + $0x190] sm:$0xff]
    %v306 = vld [vmem:[#allocation2 + $0x198] sm:$0xff]
    %v307 = vld [vmem:[#allocation2 + $0x1a0] sm:$0xff]
    %v308 = vld [vmem:[#allocation2 + $0x1a8] sm:$0xff]
    %v309 = vld [vmem:[#allocation2 + $0x1b0] sm:$0xff]
    %v310 = vld [vmem:[#allocation2 + $0x1b8] sm:$0xff]
    %v311 = vld [vmem:[#allocation2 + $0x1c0] sm:$0xff]
    %v312 = vld [vmem:[#allocation2 + $0x1c8] sm:$0xff]
    %v313 = vld [vmem:[#allocation2 + $0x1d0] sm:$0xff]
    %v314 = vld [vmem:[#allocation2 + $0x1d8] sm:$0xff]
    %v315 = vld [vmem:[#allocation2 + $0x1e0] sm:$0xff]
    %v316 = vld [vmem:[#allocation2 + $0x1e8] sm:$0xff]
    %v317 = vld [vmem:[#allocation2 + $0x1f0] sm:$0xff]
    %v318 = vld [vmem:[#allocation2 + $0x1f8] sm:$0xff]
    %v323 = vunpack.c.l.b16 %v251
    %v324 = vunpack.c.l.b16 %v252
    %v325 = vunpack.c.l.b16 %v253
    %v326 = vunpack.c.l.b16 %v254
    %v327 = vpack.c.b16 %v324, %v323
    %v328 = vpack.c.b16 %v326, %v325
    %vm331 = vcmask 261120
    %v333 = vsel %vm331, %v195, 0
    %v336 = vsel %vm331, %v196, 0
    %v339 = vsel %vm331, %v197, 0
    %v342 = vsel %vm331, %v198, 0
    %v345 = vsel %vm331, %v199, 0
    %v348 = vsel %vm331, %v200, 0
    %v351 = vsel %vm331, %v201, 0
    %v354 = vsel %vm331, %v202, 0
    %v357 = vsel %vm331, %v204, 0
    %v360 = vsel %vm331, %v206, 0
    %v363 = vsel %vm331, %v208, 0
    %v366 = vsel %vm331, %v210, 0
    %v369 = vsel %vm331, %v212, 0
    %v372 = vsel %vm331, %v214, 0
    %v375 = vsel %vm331, %v216, 0
    %v378 = vsel %vm331, %v218, 0
    %v381 = vsel %vm331, %v220, 0
    %v384 = vsel %vm331, %v222, 0
    %v387 = vsel %vm331, %v224, 0
    %v390 = vsel %vm331, %v226, 0
    %v393 = vsel %vm331, %v228, 0
    %v396 = vsel %vm331, %v230, 0
    %v399 = vsel %vm331, %v232, 0
    %v402 = vsel %vm331, %v234, 0
    %v405 = vsel %vm331, %v236, 0
    %v408 = vsel %vm331, %v238, 0
    %v411 = vsel %vm331, %v240, 0
    %v414 = vsel %vm331, %v242, 0
    %v417 = vsel %vm331, %v244, 0
    %v420 = vsel %vm331, %v246, 0
    %v423 = vsel %vm331, %v248, 0
    %v426 = vsel %vm331, %v250, 0
    %428 = vmatprep.subr.bf16.mxu0 0
    %429 = vmatpush1.bf16.msra.mxu0 %v327
    %430 = vmatprep.subr.bf16.mxu0 0
    %431 = vmatpush1.bf16.msra.mxu0 %v328
    %432 = vmatprep.subr.bf16.mxu0 0
    %433 = vmatpush1.bf16.msra.mxu0 0
    %434 = vmatprep.subr.bf16.mxu0 0
    %435 = vmatpush1.bf16.msra.mxu0 0
    %436 = vmatprep.subr.bf16.mxu0 0
    %437 = vmatpush1.bf16.msra.mxu0 0
    %438 = vmatprep.subr.bf16.mxu0 0
    %439 = vmatpush1.bf16.msra.mxu0 0
    %440 = vmatprep.subr.bf16.mxu0 0
    %441 = vmatpush1.bf16.msra.mxu0 0
    %442 = vmatprep.subr.bf16.mxu0 0
    %443 = vmatpush1.bf16.msra.mxu0 0
    %444 = vmatprep.subr.bf16.mxu0 0
    %445 = vmatpush1.bf16.msra.mxu0 0
    %446 = vmatprep.subr.bf16.mxu0 0
    %447 = vmatpush1.bf16.msra.mxu0 0
    %448 = vmatprep.subr.bf16.mxu0 0
    %449 = vmatpush1.bf16.msra.mxu0 0
    %450 = vmatprep.subr.bf16.mxu0 0
    %451 = vmatpush1.bf16.msra.mxu0 0
    %452 = vmatprep.subr.bf16.mxu0 0
    %453 = vmatpush1.bf16.msra.mxu0 0
    %454 = vmatprep.subr.bf16.mxu0 0
    %455 = vmatpush1.bf16.msra.mxu0 0
    %456 = vmatprep.subr.bf16.mxu0 0
    %457 = vmatpush1.bf16.msra.mxu0 0
    %458 = vmatprep.subr.bf16.mxu0 0
    %459 = vmatpush1.bf16.msra.mxu0 0
    %460 = vmatprep.mubr.bf16.mxu0 0
    %461 = vmatmul.mubr.bf16.gmra.mrb[0].mxu0 %v333
    %v462 = vpop.f32.mrb[0].mxu0
    %v463 = vadd.f32 0.0, %v462
    %v464 = vpop.f32.mrb[0].mxu0
    %v465 = vpop.f32.mrb[0].mxu0
    %v466 = vadd.f32 0.0, %v465
    %v467 = vpop.f32.mrb[0].mxu0
    %468 = vmatprep.mubr.bf16.mxu0 0
    %469 = vmatmul.mubr.bf16.gmra.mrb[0].mxu0 %v336
    %v470 = vpop.f32.mrb[0].mxu0
    %v471 = vadd.f32 0.0, %v470
    %v472 = vpop.f32.mrb[0].mxu0
    %v473 = vpop.f32.mrb[0].mxu0
    %v474 = vadd.f32 0.0, %v473
    %v475 = vpop.f32.mrb[0].mxu0
    %476 = vmatprep.mubr.bf16.mxu0 0
    %477 = vmatmul.mubr.bf16.gmra.mrb[0].mxu0 %v339
    %v478 = vpop.f32.mrb[0].mxu0
    %v479 = vadd.f32 0.0, %v478
    %v480 = vpop.f32.mrb[0].mxu0
    %v481 = vpop.f32.mrb[0].mxu0
    %v482 = vadd.f32 0.0, %v481
    %v483 = vpop.f32.mrb[0].mxu0
    %484 = vmatprep.mubr.bf16.mxu0 0
    %485 = vmatmul.mubr.bf16.gmra.mrb[0].mxu0 %v342
    %v486 = vpop.f32.mrb[0].mxu0
    %v487 = vadd.f32 0.0, %v486
    %v488 = vpop.f32.mrb[0].mxu0
    %v489 = vpop.f32.mrb[0].mxu0
    %v490 = vadd.f32 0.0, %v489
    %v491 = vpop.f32.mrb[0].mxu0
    %492 = vmatprep.mubr.bf16.mxu0 0
    %493 = vmatmul.mubr.bf16.gmra.mrb[0].mxu0 %v345
    %v494 = vpop.f32.mrb[0].mxu0
    %v495 = vadd.f32 0.0, %v494
    %v496 = vpop.f32.mrb[0].mxu0
    %v497 = vpop.f32.mrb[0].mxu0
    %v498 = vadd.f32 0.0, %v497
    %v499 = vpop.f32.mrb[0].mxu0
    %500 = vmatprep.mubr.bf16.mxu0 0
    %501 = vmatmul.mubr.bf16.gmra.mrb[0].mxu0 %v348
    %v502 = vpop.f32.mrb[0].mxu0
    %v503 = vadd.f32 0.0, %v502
    %v504 = vpop.f32.mrb[0].mxu0
    %v505 = vpop.f32.mrb[0].mxu0
    %v506 = vadd.f32 0.0, %v505
    %v507 = vpop.f32.mrb[0].mxu0
    %508 = vmatprep.mubr.bf16.mxu0 0
    %509 = vmatmul.mubr.bf16.gmra.mrb[0].mxu0 %v351
    %v510 = vpop.f32.mrb[0].mxu0
    %v511 = vadd.f32 0.0, %v510
    %v512 = vpop.f32.mrb[0].mxu0
    %v513 = vpop.f32.mrb[0].mxu0
    %v514 = vadd.f32 0.0, %v513
    %v515 = vpop.f32.mrb[0].mxu0
    %516 = vmatprep.mubr.bf16.mxu0 0
    %517 = vmatmul.mubr.bf16.gmra.mrb[0].mxu0 %v354
    %v518 = vpop.f32.mrb[0].mxu0
    %v519 = vadd.f32 0.0, %v518
    %v520 = vpop.f32.mrb[0].mxu0
    %v521 = vpop.f32.mrb[0].mxu0
    %v522 = vadd.f32 0.0, %v521
    %v523 = vpop.f32.mrb[0].mxu0
    %524 = vmatprep.mubr.bf16.mxu0 0
    %525 = vmatmul.mubr.bf16.gmra.mrb[0].mxu0 %v357
    %v526 = vpop.f32.mrb[0].mxu0
    %v527 = vadd.f32 0.0, %v526
    %v528 = vpop.f32.mrb[0].mxu0
    %v529 = vpop.f32.mrb[0].mxu0
    %v530 = vadd.f32 0.0, %v529
    %v531 = vpop.f32.mrb[0].mxu0
    %532 = vmatprep.mubr.bf16.mxu0 0
    %533 = vmatmul.mubr.bf16.gmra.mrb[0].mxu0 %v360
    %v534 = vpop.f32.mrb[0].mxu0
    %v535 = vadd.f32 0.0, %v534
    %v536 = vpop.f32.mrb[0].mxu0
    %v537 = vpop.f32.mrb[0].mxu0
    %v538 = vadd.f32 0.0, %v537
    %v539 = vpop.f32.mrb[0].mxu0
    %540 = vmatprep.mubr.bf16.mxu0 0
    %541 = vmatmul.mubr.bf16.gmra.mrb[0].mxu0 %v363
    %v542 = vpop.f32.mrb[0].mxu0
    %v543 = vadd.f32 0.0, %v542
    %v544 = vpop.f32.mrb[0].mxu0
    %v545 = vpop.f32.mrb[0].mxu0
    %v546 = vadd.f32 0.0, %v545
    %v547 = vpop.f32.mrb[0].mxu0
    %548 = vmatprep.mubr.bf16.mxu0 0
    %549 = vmatmul.mubr.bf16.gmra.mrb[0].mxu0 %v366
    %v550 = vpop.f32.mrb[0].mxu0
    %v551 = vadd.f32 0.0, %v550
    %v552 = vpop.f32.mrb[0].mxu0
    %v553 = vpop.f32.mrb[0].mxu0
    %v554 = vadd.f32 0.0, %v553
    %v555 = vpop.f32.mrb[0].mxu0
    %556 = vmatprep.mubr.bf16.mxu0 0
    %557 = vmatmul.mubr.bf16.gmra.mrb[0].mxu0 %v369
    %v558 = vpop.f32.mrb[0].mxu0
    %v559 = vadd.f32 0.0, %v558
    %v560 = vpop.f32.mrb[0].mxu0
    %v561 = vpop.f32.mrb[0].mxu0
    %v562 = vadd.f32 0.0, %v561
    %v563 = vpop.f32.mrb[0].mxu0
    %564 = vmatprep.mubr.bf16.mxu0 0
    %565 = vmatmul.mubr.bf16.gmra.mrb[0].mxu0 %v372
    %v566 = vpop.f32.mrb[0].mxu0
    %v567 = vadd.f32 0.0, %v566
    %v568 = vpop.f32.mrb[0].mxu0
    %v569 = vpop.f32.mrb[0].mxu0
    %v570 = vadd.f32 0.0, %v569
    %v571 = vpop.f32.mrb[0].mxu0
    %572 = vmatprep.mubr.bf16.mxu0 0
    %573 = vmatmul.mubr.bf16.gmra.mrb[0].mxu0 %v375
    %v574 = vpop.f32.mrb[0].mxu0
    %v575 = vadd.f32 0.0, %v574
    %v576 = vpop.f32.mrb[0].mxu0
    %v577 = vpop.f32.mrb[0].mxu0
    %v578 = vadd.f32 0.0, %v577
    %v579 = vpop.f32.mrb[0].mxu0
    %580 = vmatprep.mubr.bf16.mxu0 0
    %581 = vmatmul.mubr.bf16.gmra.mrb[0].mxu0 %v378
    %v582 = vpop.f32.mrb[0].mxu0
    %v583 = vadd.f32 0.0, %v582
    %v584 = vpop.f32.mrb[0].mxu0
    %v585 = vpop.f32.mrb[0].mxu0
    %v586 = vadd.f32 0.0, %v585
    %v587 = vpop.f32.mrb[0].mxu0
    %588 = vmatprep.mubr.bf16.mxu0 0
    %589 = vmatmul.mubr.bf16.gmra.mrb[0].mxu0 %v381
    %v590 = vpop.f32.mrb[0].mxu0
    %v591 = vadd.f32 0.0, %v590
    %v592 = vpop.f32.mrb[0].mxu0
    %v593 = vpop.f32.mrb[0].mxu0
    %v594 = vadd.f32 0.0, %v593
    %v595 = vpop.f32.mrb[0].mxu0
    %596 = vmatprep.mubr.bf16.mxu0 0
    %597 = vmatmul.mubr.bf16.gmra.mrb[0].mxu0 %v384
    %v598 = vpop.f32.mrb[0].mxu0
    %v599 = vadd.f32 0.0, %v598
    %v600 = vpop.f32.mrb[0].mxu0
    %v601 = vpop.f32.mrb[0].mxu0
    %v602 = vadd.f32 0.0, %v601
    %v603 = vpop.f32.mrb[0].mxu0
    %604 = vmatprep.mubr.bf16.mxu0 0
    %605 = vmatmul.mubr.bf16.gmra.mrb[0].mxu0 %v387
    %v606 = vpop.f32.mrb[0].mxu0
    %v607 = vadd.f32 0.0, %v606
    %v608 = vpop.f32.mrb[0].mxu0
    %v609 = vpop.f32.mrb[0].mxu0
    %v610 = vadd.f32 0.0, %v609
    %v611 = vpop.f32.mrb[0].mxu0
    %612 = vmatprep.mubr.bf16.mxu0 0
    %613 = vmatmul.mubr.bf16.gmra.mrb[0].mxu0 %v390
    %v614 = vpop.f32.mrb[0].mxu0
    %v615 = vadd.f32 0.0, %v614
    %v616 = vpop.f32.mrb[0].mxu0
    %v617 = vpop.f32.mrb[0].mxu0
    %v618 = vadd.f32 0.0, %v617
    %v619 = vpop.f32.mrb[0].mxu0
    %620 = vmatprep.mubr.bf16.mxu0 0
    %621 = vmatmul.mubr.bf16.gmra.mrb[0].mxu0 %v393
    %v622 = vpop.f32.mrb[0].mxu0
    %v623 = vadd.f32 0.0, %v622
    %v624 = vpop.f32.mrb[0].mxu0
    %v625 = vpop.f32.mrb[0].mxu0
    %v626 = vadd.f32 0.0, %v625
    %v627 = vpop.f32.mrb[0].mxu0
    %628 = vmatprep.mubr.bf16.mxu0 0
    %629 = vmatmul.mubr.bf16.gmra.mrb[0].mxu0 %v396
    %v630 = vpop.f32.mrb[0].mxu0
    %v631 = vadd.f32 0.0, %v630
    %v632 = vpop.f32.mrb[0].mxu0
    %v633 = vpop.f32.mrb[0].mxu0
    %v634 = vadd.f32 0.0, %v633
    %v635 = vpop.f32.mrb[0].mxu0
    %636 = vmatprep.mubr.bf16.mxu0 0
    %637 = vmatmul.mubr.bf16.gmra.mrb[0].mxu0 %v399
    %v638 = vpop.f32.mrb[0].mxu0
    %v639 = vadd.f32 0.0, %v638
    %v640 = vpop.f32.mrb[0].mxu0
    %v641 = vpop.f32.mrb[0].mxu0
    %v642 = vadd.f32 0.0, %v641
    %v643 = vpop.f32.mrb[0].mxu0
    %644 = vmatprep.mubr.bf16.mxu0 0
    %645 = vmatmul.mubr.bf16.gmra.mrb[0].mxu0 %v402
    %v646 = vpop.f32.mrb[0].mxu0
    %v647 = vadd.f32 0.0, %v646
    %v648 = vpop.f32.mrb[0].mxu0
    %v649 = vpop.f32.mrb[0].mxu0
    %v650 = vadd.f32 0.0, %v649
    %v651 = vpop.f32.mrb[0].mxu0
    %652 = vmatprep.mubr.bf16.mxu0 0
    %653 = vmatmul.mubr.bf16.gmra.mrb[0].mxu0 %v405
    %v654 = vpop.f32.mrb[0].mxu0
    %v655 = vadd.f32 0.0, %v654
    %v656 = vpop.f32.mrb[0].mxu0
    %v657 = vpop.f32.mrb[0].mxu0
    %v658 = vadd.f32 0.0, %v657
    %v659 = vpop.f32.mrb[0].mxu0
    %660 = vmatprep.mubr.bf16.mxu0 0
    %661 = vmatmul.mubr.bf16.gmra.mrb[0].mxu0 %v408
    %v662 = vpop.f32.mrb[0].mxu0
    %v663 = vadd.f32 0.0, %v662
    %v664 = vpop.f32.mrb[0].mxu0
    %v665 = vpop.f32.mrb[0].mxu0
    %v666 = vadd.f32 0.0, %v665
    %v667 = vpop.f32.mrb[0].mxu0
    %668 = vmatprep.mubr.bf16.mxu0 0
    %669 = vmatmul.mubr.bf16.gmra.mrb[0].mxu0 %v411
    %v670 = vpop.f32.mrb[0].mxu0
    %v671 = vadd.f32 0.0, %v670
    %v672 = vpop.f32.mrb[0].mxu0
    %v673 = vpop.f32.mrb[0].mxu0
    %v674 = vadd.f32 0.0, %v673
    %v675 = vpop.f32.mrb[0].mxu0
    %676 = vmatprep.mubr.bf16.mxu0 0
    %677 = vmatmul.mubr.bf16.gmra.mrb[0].mxu0 %v414
    %v678 = vpop.f32.mrb[0].mxu0
    %v679 = vadd.f32 0.0, %v678
    %v680 = vpop.f32.mrb[0].mxu0
    %v681 = vpop.f32.mrb[0].mxu0
    %v682 = vadd.f32 0.0, %v681
    %v683 = vpop.f32.mrb[0].mxu0
    %684 = vmatprep.mubr.bf16.mxu0 0
    %685 = vmatmul.mubr.bf16.gmra.mrb[0].mxu0 %v417
    %v686 = vpop.f32.mrb[0].mxu0
    %v687 = vadd.f32 0.0, %v686
    %v688 = vpop.f32.mrb[0].mxu0
    %v689 = vpop.f32.mrb[0].mxu0
    %v690 = vadd.f32 0.0, %v689
    %v691 = vpop.f32.mrb[0].mxu0
    %692 = vmatprep.mubr.bf16.mxu0 0
    %693 = vmatmul.mubr.bf16.gmra.mrb[0].mxu0 %v420
    %v694 = vpop.f32.mrb[0].mxu0
    %v695 = vadd.f32 0.0, %v694
    %v696 = vpop.f32.mrb[0].mxu0
    %v697 = vpop.f32.mrb[0].mxu0
    %v698 = vadd.f32 0.0, %v697
    %v699 = vpop.f32.mrb[0].mxu0
    %700 = vmatprep.mubr.bf16.mxu0 0
    %701 = vmatmul.mubr.bf16.gmra.mrb[0].mxu0 %v423
    %v702 = vpop.f32.mrb[0].mxu0
    %v703 = vadd.f32 0.0, %v702
    %v704 = vpop.f32.mrb[0].mxu0
    %v705 = vpop.f32.mrb[0].mxu0
    %v706 = vadd.f32 0.0, %v705
    %v707 = vpop.f32.mrb[0].mxu0
    %708 = vmatprep.mubr.bf16.mxu0 0
    %709 = vmatmul.mubr.bf16.gmra.mrb[0].mxu0 %v426
    %v710 = vpop.f32.mrb[0].mxu0
    %v711 = vadd.f32 0.0, %v710
    %v712 = vpop.f32.mrb[0].mxu0
    %v713 = vpop.f32.mrb[0].mxu0
    %v714 = vadd.f32 0.0, %v713
    %v715 = vpop.f32.mrb[0].mxu0
    %716 = vdwg.mxu0
    %v717 = vadd.f32 %v255, %v463
    %v718 = vadd.f32 %v256, %v466
    %v719 = vadd.f32 %v257, %v471
    %v720 = vadd.f32 %v258, %v474
    %v721 = vadd.f32 %v259, %v479
    %v722 = vadd.f32 %v260, %v482
    %v723 = vadd.f32 %v261, %v487
    %v724 = vadd.f32 %v262, %v490
    %v725 = vadd.f32 %v263, %v495
    %v726 = vadd.f32 %v264, %v498
    %v727 = vadd.f32 %v265, %v503
    %v728 = vadd.f32 %v266, %v506
    %v729 = vadd.f32 %v267, %v511
    %v730 = vadd.f32 %v268, %v514
    %v731 = vadd.f32 %v269, %v519
    %v732 = vadd.f32 %v270, %v522
    %v733 = vadd.f32 %v271, %v527
    %v734 = vadd.f32 %v272, %v530
    %v735 = vadd.f32 %v273, %v535
    %v736 = vadd.f32 %v274, %v538
    %v737 = vadd.f32 %v275, %v543
    %v738 = vadd.f32 %v276, %v546
    %v739 = vadd.f32 %v277, %v551
    %v740 = vadd.f32 %v278, %v554
    %v741 = vadd.f32 %v279, %v559
    %v742 = vadd.f32 %v280, %v562
    %v743 = vadd.f32 %v281, %v567
    %v744 = vadd.f32 %v282, %v570
    %v745 = vadd.f32 %v283, %v575
    %v746 = vadd.f32 %v284, %v578
    %v747 = vadd.f32 %v285, %v583
    %v748 = vadd.f32 %v286, %v586
    %v749 = vadd.f32 %v287, %v591
    %v750 = vadd.f32 %v288, %v594
    %v751 = vadd.f32 %v289, %v599
    %v752 = vadd.f32 %v290, %v602
    %v753 = vadd.f32 %v291, %v607
    %v754 = vadd.f32 %v292, %v610
    %v755 = vadd.f32 %v293, %v615
    %v756 = vadd.f32 %v294, %v618
    %v757 = vadd.f32 %v295, %v623
    %v758 = vadd.f32 %v296, %v626
    %v759 = vadd.f32 %v297, %v631
    %v760 = vadd.f32 %v298, %v634
    %v761 = vadd.f32 %v299, %v639
    %v762 = vadd.f32 %v300, %v642
    %v763 = vadd.f32 %v301, %v647
    %v764 = vadd.f32 %v302, %v650
    %v765 = vadd.f32 %v303, %v655
    %v766 = vadd.f32 %v304, %v658
    %v767 = vadd.f32 %v305, %v663
    %v768 = vadd.f32 %v306, %v666
    %v769 = vadd.f32 %v307, %v671
    %v770 = vadd.f32 %v308, %v674
    %v771 = vadd.f32 %v309, %v679
    %v772 = vadd.f32 %v310, %v682
    %v773 = vadd.f32 %v311, %v687
    %v774 = vadd.f32 %v312, %v690
    %v775 = vadd.f32 %v313, %v695
    %v776 = vadd.f32 %v314, %v698
    %v777 = vadd.f32 %v315, %v703
    %v778 = vadd.f32 %v316, %v706
    %v779 = vadd.f32 %v317, %v711
    %v780 = vadd.f32 %v318, %v714
    %781 = vst [vmem:[#allocation2] sm:$0xff] %v717
    %782 = vst [vmem:[#allocation2 + $0x8] sm:$0xff] %v718
    %783 = vst [vmem:[#allocation2 + $0x10] sm:$0xff] %v719
    %784 = vst [vmem:[#allocation2 + $0x18] sm:$0xff] %v720
    %785 = vst [vmem:[#allocation2 + $0x20] sm:$0xff] %v721
    %786 = vst [vmem:[#allocation2 + $0x28] sm:$0xff] %v722
    %787 = vst [vmem:[#allocation2 + $0x30] sm:$0xff] %v723
    %788 = vst [vmem:[#allocation2 + $0x38] sm:$0xff] %v724
    %789 = vst [vmem:[#allocation2 + $0x40] sm:$0xff] %v725
    %790 = vst [vmem:[#allocation2 + $0x48] sm:$0xff] %v726
    %791 = vst [vmem:[#allocation2 + $0x50] sm:$0xff] %v727
    %792 = vst [vmem:[#allocation2 + $0x58] sm:$0xff] %v728
    %793 = vst [vmem:[#allocation2 + $0x60] sm:$0xff] %v729
    %794 = vst [vmem:[#allocation2 + $0x68] sm:$0xff] %v730
    %795 = vst [vmem:[#allocation2 + $0x70] sm:$0xff] %v731
    %796 = vst [vmem:[#allocation2 + $0x78] sm:$0xff] %v732
    %797 = vst [vmem:[#allocation2 + $0x80] sm:$0xff] %v733
    %798 = vst [vmem:[#allocation2 + $0x88] sm:$0xff] %v734
    %799 = vst [vmem:[#allocation2 + $0x90] sm:$0xff] %v735
    %800 = vst [vmem:[#allocation2 + $0x98] sm:$0xff] %v736
    %801 = vst [vmem:[#allocation2 + $0xa0] sm:$0xff] %v737
    %802 = vst [vmem:[#allocation2 + $0xa8] sm:$0xff] %v738
    %803 = vst [vmem:[#allocation2 + $0xb0] sm:$0xff] %v739
    %804 = vst [vmem:[#allocation2 + $0xb8] sm:$0xff] %v740
    %805 = vst [vmem:[#allocation2 + $0xc0] sm:$0xff] %v741
    %806 = vst [vmem:[#allocation2 + $0xc8] sm:$0xff] %v742
    %807 = vst [vmem:[#allocation2 + $0xd0] sm:$0xff] %v743
    %808 = vst [vmem:[#allocation2 + $0xd8] sm:$0xff] %v744
    %809 = vst [vmem:[#allocation2 + $0xe0] sm:$0xff] %v745
    %810 = vst [vmem:[#allocation2 + $0xe8] sm:$0xff] %v746
    %811 = vst [vmem:[#allocation2 + $0xf0] sm:$0xff] %v747
    %812 = vst [vmem:[#allocation2 + $0xf8] sm:$0xff] %v748
    %813 = vst [vmem:[#allocation2 + $0x100] sm:$0xff] %v749
    %814 = vst [vmem:[#allocation2 + $0x108] sm:$0xff] %v750
    %815 = vst [vmem:[#allocation2 + $0x110] sm:$0xff] %v751
    %816 = vst [vmem:[#allocation2 + $0x118] sm:$0xff] %v752
    %817 = vst [vmem:[#allocation2 + $0x120] sm:$0xff] %v753
    %818 = vst [vmem:[#allocation2 + $0x128] sm:$0xff] %v754
    %819 = vst [vmem:[#allocation2 + $0x130] sm:$0xff] %v755
    %820 = vst [vmem:[#allocation2 + $0x138] sm:$0xff] %v756
    %821 = vst [vmem:[#allocation2 + $0x140] sm:$0xff] %v757
    %822 = vst [vmem:[#allocation2 + $0x148] sm:$0xff] %v758
    %823 = vst [vmem:[#allocation2 + $0x150] sm:$0xff] %v759
    %824 = vst [vmem:[#allocation2 + $0x158] sm:$0xff] %v760
    %825 = vst [vmem:[#allocation2 + $0x160] sm:$0xff] %v761
    %826 = vst [vmem:[#allocation2 + $0x168] sm:$0xff] %v762
    %827 = vst [vmem:[#allocation2 + $0x170] sm:$0xff] %v763
    %828 = vst [vmem:[#allocation2 + $0x178] sm:$0xff] %v764
    %829 = vst [vmem:[#allocation2 + $0x180] sm:$0xff] %v765
    %830 = vst [vmem:[#allocation2 + $0x188] sm:$0xff] %v766
    %831 = vst [vmem:[#allocation2 + $0x190] sm:$0xff] %v767
    %832 = vst [vmem:[#allocation2 + $0x198] sm:$0xff] %v768
    %833 = vst [vmem:[#allocation2 + $0x1a0] sm:$0xff] %v769
    %834 = vst [vmem:[#allocation2 + $0x1a8] sm:$0xff] %v770
    %835 = vst [vmem:[#allocation2 + $0x1b0] sm:$0xff] %v771
    %836 = vst [vmem:[#allocation2 + $0x1b8] sm:$0xff] %v772
    %837 = vst [vmem:[#allocation2 + $0x1c0] sm:$0xff] %v773
    %838 = vst [vmem:[#allocation2 + $0x1c8] sm:$0xff] %v774
    %839 = vst [vmem:[#allocation2 + $0x1d0] sm:$0xff] %v775
    %840 = vst [vmem:[#allocation2 + $0x1d8] sm:$0xff] %v776
    %841 = vst [vmem:[#allocation2 + $0x1e0] sm:$0xff] %v777
    %842 = vst [vmem:[#allocation2 + $0x1e8] sm:$0xff] %v778
    %843 = vst [vmem:[#allocation2 + $0x1f0] sm:$0xff] %v779
    %844 = vst [vmem:[#allocation2 + $0x1f8] sm:$0xff] %v780
    %v861 = vunpack.c.l.b16 %v60
    %v862 = vunpack.c.l.b16 %v61
    %v863 = vunpack.c.l.b16 %v62
    %v864 = vunpack.c.l.b16 %v63
    %v865 = vunpack.c.l.b16 %v64
    %v866 = vunpack.c.l.b16 %v65
    %v867 = vunpack.c.l.b16 %v66
    %v868 = vunpack.c.l.b16 %v67
    %v869 = vunpack.c.l.b16 %v68
    %v870 = vunpack.c.l.b16 %v69
    %v871 = vunpack.c.l.b16 %v70
    %v872 = vunpack.c.l.b16 %v71
    %v873 = vunpack.c.l.b16 %v72
    %v874 = vunpack.c.l.b16 %v73
    %v875 = vunpack.c.l.b16 %v74
    %v876 = vunpack.c.l.b16 %v75
    %v877 = vpack.c.b16 %v862, %v861
    %v878 = vpack.c.b16 %v864, %v863
    %v879 = vpack.c.b16 %v866, %v865
    %v880 = vpack.c.b16 %v868, %v867
    %v881 = vpack.c.b16 %v870, %v869
    %v882 = vpack.c.b16 %v872, %v871
    %v883 = vpack.c.b16 %v874, %v873
    %v884 = vpack.c.b16 %v876, %v875
    %901 = vmatprep.subr.bf16.mxu0 0
    %902 = vmatpush1.bf16.msra.mxu0 %v195
    %903 = vmatprep.subr.bf16.mxu0 0
    %904 = vmatpush1.bf16.msra.mxu0 %v196
    %905 = vmatprep.subr.bf16.mxu0 0
    %906 = vmatpush1.bf16.msra.mxu0 %v197
    %907 = vmatprep.subr.bf16.mxu0 0
    %908 = vmatpush1.bf16.msra.mxu0 %v198
    %909 = vmatprep.subr.bf16.mxu0 0
    %910 = vmatpush1.bf16.msra.mxu0 %v199
    %911 = vmatprep.subr.bf16.mxu0 0
    %912 = vmatpush1.bf16.msra.mxu0 %v200
    %913 = vmatprep.subr.bf16.mxu0 0
    %914 = vmatpush1.bf16.msra.mxu0 %v201
    %915 = vmatprep.subr.bf16.mxu0 0
    %916 = vmatpush1.bf16.msra.mxu0 %v202
    %917 = vmatprep.subr.bf16.mxu0 0
    %918 = vmatpush1.bf16.msra.mxu0 0
    %919 = vmatprep.subr.bf16.mxu0 0
    %920 = vmatpush1.bf16.msra.mxu0 0
    %921 = vmatprep.subr.bf16.mxu0 0
    %922 = vmatpush1.bf16.msra.mxu0 0
    %923 = vmatprep.subr.bf16.mxu0 0
    %924 = vmatpush1.bf16.msra.mxu0 0
    %925 = vmatprep.subr.bf16.mxu0 0
    %926 = vmatpush1.bf16.msra.mxu0 0
    %927 = vmatprep.subr.bf16.mxu0 0
    %928 = vmatpush1.bf16.msra.mxu0 0
    %929 = vmatprep.subr.bf16.mxu0 0
    %930 = vmatpush1.bf16.msra.mxu0 0
    %931 = vmatprep.subr.bf16.mxu0 0
    %932 = vmatpush1.bf16.msra.mxu0 0
    %933 = vmatprep.mubr.bf16.mxu0 0
    %934 = vmatmul.mubr.bf16.gmra.mrb[0].mxu0 %v877
    %v935 = vpop.f32.mrb[0].mxu0
    %v936 = vadd.f32 0.0, %v935
    %v937 = vpop.f32.mrb[0].mxu0
    %v938 = vpop.f32.mrb[0].mxu0
    %v939 = vadd.f32 0.0, %v938
    %v940 = vpop.f32.mrb[0].mxu0
    %941 = vmatprep.mubr.bf16.mxu0 0
    %942 = vmatmul.mubr.bf16.gmra.mrb[0].mxu0 %v878
    %v943 = vpop.f32.mrb[0].mxu0
    %v944 = vadd.f32 0.0, %v943
    %v945 = vpop.f32.mrb[0].mxu0
    %v946 = vpop.f32.mrb[0].mxu0
    %v947 = vadd.f32 0.0, %v946
    %v948 = vpop.f32.mrb[0].mxu0
    %949 = vmatprep.mubr.bf16.mxu0 0
    %950 = vmatmul.mubr.bf16.gmra.mrb[0].mxu0 %v879
    %v951 = vpop.f32.mrb[0].mxu0
    %v952 = vadd.f32 0.0, %v951
    %v953 = vpop.f32.mrb[0].mxu0
    %v954 = vpop.f32.mrb[0].mxu0
    %v955 = vadd.f32 0.0, %v954
    %v956 = vpop.f32.mrb[0].mxu0
    %957 = vmatprep.mubr.bf16.mxu0 0
    %958 = vmatmul.mubr.bf16.gmra.mrb[0].mxu0 %v880
    %v959 = vpop.f32.mrb[0].mxu0
    %v960 = vadd.f32 0.0, %v959
    %v961 = vpop.f32.mrb[0].mxu0
    %v962 = vpop.f32.mrb[0].mxu0
    %v963 = vadd.f32 0.0, %v962
    %v964 = vpop.f32.mrb[0].mxu0
    %965 = vmatprep.mubr.bf16.mxu0 0
    %966 = vmatmul.mubr.bf16.gmra.mrb[0].mxu0 %v881
    %v967 = vpop.f32.mrb[0].mxu0
    %v968 = vadd.f32 0.0, %v967
    %v969 = vpop.f32.mrb[0].mxu0
    %v970 = vpop.f32.mrb[0].mxu0
    %v971 = vadd.f32 0.0, %v970
    %v972 = vpop.f32.mrb[0].mxu0
    %973 = vmatprep.mubr.bf16.mxu0 0
    %974 = vmatmul.mubr.bf16.gmra.mrb[0].mxu0 %v882
    %v975 = vpop.f32.mrb[0].mxu0
    %v976 = vadd.f32 0.0, %v975
    %v977 = vpop.f32.mrb[0].mxu0
    %v978 = vpop.f32.mrb[0].mxu0
    %v979 = vadd.f32 0.0, %v978
    %v980 = vpop.f32.mrb[0].mxu0
    %981 = vmatprep.mubr.bf16.mxu0 0
    %982 = vmatmul.mubr.bf16.gmra.mrb[0].mxu0 %v883
    %v983 = vpop.f32.mrb[0].mxu0
    %v984 = vadd.f32 0.0, %v983
    %v985 = vpop.f32.mrb[0].mxu0
    %v986 = vpop.f32.mrb[0].mxu0
    %v987 = vadd.f32 0.0, %v986
    %v988 = vpop.f32.mrb[0].mxu0
    %989 = vmatprep.mubr.bf16.mxu0 0
    %990 = vmatmul.mubr.bf16.gmra.mrb[0].mxu0 %v884
    %v991 = vpop.f32.mrb[0].mxu0
    %v992 = vadd.f32 0.0, %v991
    %v993 = vpop.f32.mrb[0].mxu0
    %v994 = vpop.f32.mrb[0].mxu0
    %v995 = vadd.f32 0.0, %v994
    %v996 = vpop.f32.mrb[0].mxu0
    %997 = vdwg.mxu0
    %v998 = vpack.c.bf16 %v939, %v936
    %v999 = vpack.c.bf16 %v947, %v944
    %v1000 = vpack.c.bf16 %v955, %v952
    %v1001 = vpack.c.bf16 %v963, %v960
    %v1002 = vpack.c.bf16 %v971, %v968
    %v1003 = vpack.c.bf16 %v979, %v976
    %v1004 = vpack.c.bf16 %v987, %v984
    %v1005 = vpack.c.bf16 %v995, %v992
    %1014 = vrot.lane.b32.xlu0 %v998, 96
    %v1015 = vpop.permute.xlu0 %1014
    %1016 = vrot.lane.b32.xlu0 %v999, 96
    %v1017 = vpop.permute.xlu0 %1016
    %1018 = vrot.lane.b32.xlu0 %v1000, 96
    %v1019 = vpop.permute.xlu0 %1018
    %1020 = vrot.lane.b32.xlu0 %v1001, 96
    %v1021 = vpop.permute.xlu0 %1020
    %1022 = vrot.lane.b32.xlu0 %v1002, 96
    %v1023 = vpop.permute.xlu0 %1022
    %1024 = vrot.lane.b32.xlu0 %v1003, 96
    %v1025 = vpop.permute.xlu0 %1024
    %1026 = vrot.lane.b32.xlu0 %v1004, 96
    %v1027 = vpop.permute.xlu0 %1026
    %1028 = vrot.lane.b32.xlu0 %v1005, 96
    %v1029 = vpop.permute.xlu0 %1028
    %1030 = vrot.lane.b32.xlu0 %v998, 64
    %v1031 = vpop.permute.xlu0 %1030
    %1032 = vrot.lane.b32.xlu0 %v999, 64
    %v1033 = vpop.permute.xlu0 %1032
    %1034 = vrot.lane.b32.xlu0 %v1000, 64
    %v1035 = vpop.permute.xlu0 %1034
    %1036 = vrot.lane.b32.xlu0 %v1001, 64
    %v1037 = vpop.permute.xlu0 %1036
    %1038 = vrot.lane.b32.xlu0 %v1002, 64
    %v1039 = vpop.permute.xlu0 %1038
    %1040 = vrot.lane.b32.xlu0 %v1003, 64
    %v1041 = vpop.permute.xlu0 %1040
    %1042 = vrot.lane.b32.xlu0 %v1004, 64
    %v1043 = vpop.permute.xlu0 %1042
    %1044 = vrot.lane.b32.xlu0 %v1005, 64
    %v1045 = vpop.permute.xlu0 %1044
    %1046 = vrot.lane.b32.xlu0 %v998, 32
    %v1047 = vpop.permute.xlu0 %1046
    %1048 = vrot.lane.b32.xlu0 %v999, 32
    %v1049 = vpop.permute.xlu0 %1048
    %1050 = vrot.lane.b32.xlu0 %v1000, 32
    %v1051 = vpop.permute.xlu0 %1050
    %1052 = vrot.lane.b32.xlu0 %v1001, 32
    %v1053 = vpop.permute.xlu0 %1052
    %1054 = vrot.lane.b32.xlu0 %v1002, 32
    %v1055 = vpop.permute.xlu0 %1054
    %1056 = vrot.lane.b32.xlu0 %v1003, 32
    %v1057 = vpop.permute.xlu0 %1056
    %1058 = vrot.lane.b32.xlu0 %v1004, 32
    %v1059 = vpop.permute.xlu0 %1058
    %1060 = vrot.lane.b32.xlu0 %v1005, 32
    %v1061 = vpop.permute.xlu0 %1060
    %v1062 = vld [vmem:[#allocation8 + $0x10] sm:$0xf]
    %v1063 = vld [vmem:[#allocation8 + $0x14] sm:$0xf]
    %v1064 = vld [vmem:[#allocation8 + $0x18] sm:$0xf]
    %v1065 = vld [vmem:[#allocation8 + $0x1c] sm:$0xf]
    %v1066 = vld [vmem:[#allocation2] sm:$0xff]
    %v1067 = vld [vmem:[#allocation2 + $0x8] sm:$0xff]
    %v1068 = vld [vmem:[#allocation2 + $0x10] sm:$0xff]
    %v1069 = vld [vmem:[#allocation2 + $0x18] sm:$0xff]
    %v1070 = vld [vmem:[#allocation2 + $0x20] sm:$0xff]
    %v1071 = vld [vmem:[#allocation2 + $0x28] sm:$0xff]
    %v1072 = vld [vmem:[#allocation2 + $0x30] sm:$0xff]
    %v1073 = vld [vmem:[#allocation2 + $0x38] sm:$0xff]
    %v1074 = vld [vmem:[#allocation2 + $0x40] sm:$0xff]
    %v1075 = vld [vmem:[#allocation2 + $0x48] sm:$0xff]
    %v1076 = vld [vmem:[#allocation2 + $0x50] sm:$0xff]
    %v1077 = vld [vmem:[#allocation2 + $0x58] sm:$0xff]
    %v1078 = vld [vmem:[#allocation2 + $0x60] sm:$0xff]
    %v1079 = vld [vmem:[#allocation2 + $0x68] sm:$0xff]
    %v1080 = vld [vmem:[#allocation2 + $0x70] sm:$0xff]
    %v1081 = vld [vmem:[#allocation2 + $0x78] sm:$0xff]
    %v1082 = vld [vmem:[#allocation2 + $0x80] sm:$0xff]
    %v1083 = vld [vmem:[#allocation2 + $0x88] sm:$0xff]
    %v1084 = vld [vmem:[#allocation2 + $0x90] sm:$0xff]
    %v1085 = vld [vmem:[#allocation2 + $0x98] sm:$0xff]
    %v1086 = vld [vmem:[#allocation2 + $0xa0] sm:$0xff]
    %v1087 = vld [vmem:[#allocation2 + $0xa8] sm:$0xff]
    %v1088 = vld [vmem:[#allocation2 + $0xb0] sm:$0xff]
    %v1089 = vld [vmem:[#allocation2 + $0xb8] sm:$0xff]
    %v1090 = vld [vmem:[#allocation2 + $0xc0] sm:$0xff]
    %v1091 = vld [vmem:[#allocation2 + $0xc8] sm:$0xff]
    %v1092 = vld [vmem:[#allocation2 + $0xd0] sm:$0xff]
    %v1093 = vld [vmem:[#allocation2 + $0xd8] sm:$0xff]
    %v1094 = vld [vmem:[#allocation2 + $0xe0] sm:$0xff]
    %v1095 = vld [vmem:[#allocation2 + $0xe8] sm:$0xff]
    %v1096 = vld [vmem:[#allocation2 + $0xf0] sm:$0xff]
    %v1097 = vld [vmem:[#allocation2 + $0xf8] sm:$0xff]
    %v1098 = vld [vmem:[#allocation2 + $0x100] sm:$0xff]
    %v1099 = vld [vmem:[#allocation2 + $0x108] sm:$0xff]
    %v1100 = vld [vmem:[#allocation2 + $0x110] sm:$0xff]
    %v1101 = vld [vmem:[#allocation2 + $0x118] sm:$0xff]
    %v1102 = vld [vmem:[#allocation2 + $0x120] sm:$0xff]
    %v1103 = vld [vmem:[#allocation2 + $0x128] sm:$0xff]
    %v1104 = vld [vmem:[#allocation2 + $0x130] sm:$0xff]
    %v1105 = vld [vmem:[#allocation2 + $0x138] sm:$0xff]
    %v1106 = vld [vmem:[#allocation2 + $0x140] sm:$0xff]
    %v1107 = vld [vmem:[#allocation2 + $0x148] sm:$0xff]
    %v1108 = vld [vmem:[#allocation2 + $0x150] sm:$0xff]
    %v1109 = vld [vmem:[#allocation2 + $0x158] sm:$0xff]
    %v1110 = vld [vmem:[#allocation2 + $0x160] sm:$0xff]
    %v1111 = vld [vmem:[#allocation2 + $0x168] sm:$0xff]
    %v1112 = vld [vmem:[#allocation2 + $0x170] sm:$0xff]
    %v1113 = vld [vmem:[#allocation2 + $0x178] sm:$0xff]
    %v1114 = vld [vmem:[#allocation2 + $0x180] sm:$0xff]
    %v1115 = vld [vmem:[#allocation2 + $0x188] sm:$0xff]
    %v1116 = vld [vmem:[#allocation2 + $0x190] sm:$0xff]
    %v1117 = vld [vmem:[#allocation2 + $0x198] sm:$0xff]
    %v1118 = vld [vmem:[#allocation2 + $0x1a0] sm:$0xff]
    %v1119 = vld [vmem:[#allocation2 + $0x1a8] sm:$0xff]
    %v1120 = vld [vmem:[#allocation2 + $0x1b0] sm:$0xff]
    %v1121 = vld [vmem:[#allocation2 + $0x1b8] sm:$0xff]
    %v1122 = vld [vmem:[#allocation2 + $0x1c0] sm:$0xff]
    %v1123 = vld [vmem:[#allocation2 + $0x1c8] sm:$0xff]
    %v1124 = vld [vmem:[#allocation2 + $0x1d0] sm:$0xff]
    %v1125 = vld [vmem:[#allocation2 + $0x1d8] sm:$0xff]
    %v1126 = vld [vmem:[#allocation2 + $0x1e0] sm:$0xff]
    %v1127 = vld [vmem:[#allocation2 + $0x1e8] sm:$0xff]
    %v1128 = vld [vmem:[#allocation2 + $0x1f0] sm:$0xff]
    %v1129 = vld [vmem:[#allocation2 + $0x1f8] sm:$0xff]
    %v1134 = vunpack.c.l.b16 %v1062
    %v1135 = vunpack.c.l.b16 %v1063
    %v1136 = vunpack.c.l.b16 %v1064
    %v1137 = vunpack.c.l.b16 %v1065
    %v1138 = vpack.c.b16 %v1135, %v1134
    %v1139 = vpack.c.b16 %v1137, %v1136
    %v1143 = vsel %vm331, %v998, 0
    %v1146 = vsel %vm331, %v999, 0
    %v1149 = vsel %vm331, %v1000, 0
    %v1152 = vsel %vm331, %v1001, 0
    %v1155 = vsel %vm331, %v1002, 0
    %v1158 = vsel %vm331, %v1003, 0
    %v1161 = vsel %vm331, %v1004, 0
    %v1164 = vsel %vm331, %v1005, 0
    %v1167 = vsel %vm331, %v1015, 0
    %v1170 = vsel %vm331, %v1017, 0
    %v1173 = vsel %vm331, %v1019, 0
    %v1176 = vsel %vm331, %v1021, 0
    %v1179 = vsel %vm331, %v1023, 0
    %v1182 = vsel %vm331, %v1025, 0
    %v1185 = vsel %vm331, %v1027, 0
    %v1188 = vsel %vm331, %v1029, 0
    %v1191 = vsel %vm331, %v1031, 0
    %v1194 = vsel %vm331, %v1033, 0
    %v1197 = vsel %vm331, %v1035, 0
    %v1200 = vsel %vm331, %v1037, 0
    %v1203 = vsel %vm331, %v1039, 0
    %v1206 = vsel %vm331, %v1041, 0
    %v1209 = vsel %vm331, %v1043, 0
    %v1212 = vsel %vm331, %v1045, 0
    %v1215 = vsel %vm331, %v1047, 0
    %v1218 = vsel %vm331, %v1049, 0
    %v1221 = vsel %vm331, %v1051, 0
    %v1224 = vsel %vm331, %v1053, 0
    %v1227 = vsel %vm331, %v1055, 0
    %v1230 = vsel %vm331, %v1057, 0
    %v1233 = vsel %vm331, %v1059, 0
    %v1236 = vsel %vm331, %v1061, 0
    %1238 = vmatprep.subr.bf16.mxu0 0
    %1239 = vmatpush1.bf16.msra.mxu0 %v1138
    %1240 = vmatprep.subr.bf16.mxu0 0
    %1241 = vmatpush1.bf16.msra.mxu0 %v1139
    %1242 = vmatprep.subr.bf16.mxu0 0
    %1243 = vmatpush1.bf16.msra.mxu0 0
    %1244 = vmatprep.subr.bf16.mxu0 0
    %1245 = vmatpush1.bf16.msra.mxu0 0
    %1246 = vmatprep.subr.bf16.mxu0 0
    %1247 = vmatpush1.bf16.msra.mxu0 0
    %1248 = vmatprep.subr.bf16.mxu0 0
    %1249 = vmatpush1.bf16.msra.mxu0 0
    %1250 = vmatprep.subr.bf16.mxu0 0
    %1251 = vmatpush1.bf16.msra.mxu0 0
    %1252 = vmatprep.subr.bf16.mxu0 0
    %1253 = vmatpush1.bf16.msra.mxu0 0
    %1254 = vmatprep.subr.bf16.mxu0 0
    %1255 = vmatpush1.bf16.msra.mxu0 0
    %1256 = vmatprep.subr.bf16.mxu0 0
    %1257 = vmatpush1.bf16.msra.mxu0 0
    %1258 = vmatprep.subr.bf16.mxu0 0
    %1259 = vmatpush1.bf16.msra.mxu0 0
    %1260 = vmatprep.subr.bf16.mxu0 0
    %1261 = vmatpush1.bf16.msra.mxu0 0
    %1262 = vmatprep.subr.bf16.mxu0 0
    %1263 = vmatpush1.bf16.msra.mxu0 0
    %1264 = vmatprep.subr.bf16.mxu0 0
    %1265 = vmatpush1.bf16.msra.mxu0 0
    %1266 = vmatprep.subr.bf16.mxu0 0
    %1267 = vmatpush1.bf16.msra.mxu0 0
    %1268 = vmatprep.subr.bf16.mxu0 0
    %1269 = vmatpush1.bf16.msra.mxu0 0
    %1270 = vmatprep.mubr.bf16.mxu0 0
    %1271 = vmatmul.mubr.bf16.gmra.mrb[0].mxu0 %v1143
    %v1272 = vpop.f32.mrb[0].mxu0
    %v1273 = vadd.f32 0.0, %v1272
    %v1274 = vpop.f32.mrb[0].mxu0
    %v1275 = vpop.f32.mrb[0].mxu0
    %v1276 = vadd.f32 0.0, %v1275
    %v1277 = vpop.f32.mrb[0].mxu0
    %1278 = vmatprep.mubr.bf16.mxu0 0
    %1279 = vmatmul.mubr.bf16.gmra.mrb[0].mxu0 %v1146
    %v1280 = vpop.f32.mrb[0].mxu0
    %v1281 = vadd.f32 0.0, %v1280
    %v1282 = vpop.f32.mrb[0].mxu0
    %v1283 = vpop.f32.mrb[0].mxu0
    %v1284 = vadd.f32 0.0, %v1283
    %v1285 = vpop.f32.mrb[0].mxu0
    %1286 = vmatprep.mubr.bf16.mxu0 0
    %1287 = vmatmul.mubr.bf16.gmra.mrb[0].mxu0 %v1149
    %v1288 = vpop.f32.mrb[0].mxu0
    %v1289 = vadd.f32 0.0, %v1288
    %v1290 = vpop.f32.mrb[0].mxu0
    %v1291 = vpop.f32.mrb[0].mxu0
    %v1292 = vadd.f32 0.0, %v1291
    %v1293 = vpop.f32.mrb[0].mxu0
    %1294 = vmatprep.mubr.bf16.mxu0 0
    %1295 = vmatmul.mubr.bf16.gmra.mrb[0].mxu0 %v1152
    %v1296 = vpop.f32.mrb[0].mxu0
    %v1297 = vadd.f32 0.0, %v1296
    %v1298 = vpop.f32.mrb[0].mxu0
    %v1299 = vpop.f32.mrb[0].mxu0
    %v1300 = vadd.f32 0.0, %v1299
    %v1301 = vpop.f32.mrb[0].mxu0
    %1302 = vmatprep.mubr.bf16.mxu0 0
    %1303 = vmatmul.mubr.bf16.gmra.mrb[0].mxu0 %v1155
    %v1304 = vpop.f32.mrb[0].mxu0
    %v1305 = vadd.f32 0.0, %v1304
    %v1306 = vpop.f32.mrb[0].mxu0
    %v1307 = vpop.f32.mrb[0].mxu0
    %v1308 = vadd.f32 0.0, %v1307
    %v1309 = vpop.f32.mrb[0].mxu0
    %1310 = vmatprep.mubr.bf16.mxu0 0
    %1311 = vmatmul.mubr.bf16.gmra.mrb[0].mxu0 %v1158
    %v1312 = vpop.f32.mrb[0].mxu0
    %v1313 = vadd.f32 0.0, %v1312
    %v1314 = vpop.f32.mrb[0].mxu0
    %v1315 = vpop.f32.mrb[0].mxu0
    %v1316 = vadd.f32 0.0, %v1315
    %v1317 = vpop.f32.mrb[0].mxu0
    %1318 = vmatprep.mubr.bf16.mxu0 0
    %1319 = vmatmul.mubr.bf16.gmra.mrb[0].mxu0 %v1161
    %v1320 = vpop.f32.mrb[0].mxu0
    %v1321 = vadd.f32 0.0, %v1320
    %v1322 = vpop.f32.mrb[0].mxu0
    %v1323 = vpop.f32.mrb[0].mxu0
    %v1324 = vadd.f32 0.0, %v1323
    %v1325 = vpop.f32.mrb[0].mxu0
    %1326 = vmatprep.mubr.bf16.mxu0 0
    %1327 = vmatmul.mubr.bf16.gmra.mrb[0].mxu0 %v1164
    %v1328 = vpop.f32.mrb[0].mxu0
    %v1329 = vadd.f32 0.0, %v1328
    %v1330 = vpop.f32.mrb[0].mxu0
    %v1331 = vpop.f32.mrb[0].mxu0
    %v1332 = vadd.f32 0.0, %v1331
    %v1333 = vpop.f32.mrb[0].mxu0
    %1334 = vmatprep.mubr.bf16.mxu0 0
    %1335 = vmatmul.mubr.bf16.gmra.mrb[0].mxu0 %v1167
    %v1336 = vpop.f32.mrb[0].mxu0
    %v1337 = vadd.f32 0.0, %v1336
    %v1338 = vpop.f32.mrb[0].mxu0
    %v1339 = vpop.f32.mrb[0].mxu0
    %v1340 = vadd.f32 0.0, %v1339
    %v1341 = vpop.f32.mrb[0].mxu0
    %1342 = vmatprep.mubr.bf16.mxu0 0
    %1343 = vmatmul.mubr.bf16.gmra.mrb[0].mxu0 %v1170
    %v1344 = vpop.f32.mrb[0].mxu0
    %v1345 = vadd.f32 0.0, %v1344
    %v1346 = vpop.f32.mrb[0].mxu0
    %v1347 = vpop.f32.mrb[0].mxu0
    %v1348 = vadd.f32 0.0, %v1347
    %v1349 = vpop.f32.mrb[0].mxu0
    %1350 = vmatprep.mubr.bf16.mxu0 0
    %1351 = vmatmul.mubr.bf16.gmra.mrb[0].mxu0 %v1173
    %v1352 = vpop.f32.mrb[0].mxu0
    %v1353 = vadd.f32 0.0, %v1352
    %v1354 = vpop.f32.mrb[0].mxu0
    %v1355 = vpop.f32.mrb[0].mxu0
    %v1356 = vadd.f32 0.0, %v1355
    %v1357 = vpop.f32.mrb[0].mxu0
    %1358 = vmatprep.mubr.bf16.mxu0 0
    %1359 = vmatmul.mubr.bf16.gmra.mrb[0].mxu0 %v1176
    %v1360 = vpop.f32.mrb[0].mxu0
    %v1361 = vadd.f32 0.0, %v1360
    %v1362 = vpop.f32.mrb[0].mxu0
    %v1363 = vpop.f32.mrb[0].mxu0
    %v1364 = vadd.f32 0.0, %v1363
    %v1365 = vpop.f32.mrb[0].mxu0
    %1366 = vmatprep.mubr.bf16.mxu0 0
    %1367 = vmatmul.mubr.bf16.gmra.mrb[0].mxu0 %v1179
    %v1368 = vpop.f32.mrb[0].mxu0
    %v1369 = vadd.f32 0.0, %v1368
    %v1370 = vpop.f32.mrb[0].mxu0
    %v1371 = vpop.f32.mrb[0].mxu0
    %v1372 = vadd.f32 0.0, %v1371
    %v1373 = vpop.f32.mrb[0].mxu0
    %1374 = vmatprep.mubr.bf16.mxu0 0
    %1375 = vmatmul.mubr.bf16.gmra.mrb[0].mxu0 %v1182
    %v1376 = vpop.f32.mrb[0].mxu0
    %v1377 = vadd.f32 0.0, %v1376
    %v1378 = vpop.f32.mrb[0].mxu0
    %v1379 = vpop.f32.mrb[0].mxu0
    %v1380 = vadd.f32 0.0, %v1379
    %v1381 = vpop.f32.mrb[0].mxu0
    %1382 = vmatprep.mubr.bf16.mxu0 0
    %1383 = vmatmul.mubr.bf16.gmra.mrb[0].mxu0 %v1185
    %v1384 = vpop.f32.mrb[0].mxu0
    %v1385 = vadd.f32 0.0, %v1384
    %v1386 = vpop.f32.mrb[0].mxu0
    %v1387 = vpop.f32.mrb[0].mxu0
    %v1388 = vadd.f32 0.0, %v1387
    %v1389 = vpop.f32.mrb[0].mxu0
    %1390 = vmatprep.mubr.bf16.mxu0 0
    %1391 = vmatmul.mubr.bf16.gmra.mrb[0].mxu0 %v1188
    %v1392 = vpop.f32.mrb[0].mxu0
    %v1393 = vadd.f32 0.0, %v1392
    %v1394 = vpop.f32.mrb[0].mxu0
    %v1395 = vpop.f32.mrb[0].mxu0
    %v1396 = vadd.f32 0.0, %v1395
    %v1397 = vpop.f32.mrb[0].mxu0
    %1398 = vmatprep.mubr.bf16.mxu0 0
    %1399 = vmatmul.mubr.bf16.gmra.mrb[0].mxu0 %v1191
    %v1400 = vpop.f32.mrb[0].mxu0
    %v1401 = vadd.f32 0.0, %v1400
    %v1402 = vpop.f32.mrb[0].mxu0
    %v1403 = vpop.f32.mrb[0].mxu0
    %v1404 = vadd.f32 0.0, %v1403
    %v1405 = vpop.f32.mrb[0].mxu0
    %1406 = vmatprep.mubr.bf16.mxu0 0
    %1407 = vmatmul.mubr.bf16.gmra.mrb[0].mxu0 %v1194
    %v1408 = vpop.f32.mrb[0].mxu0
    %v1409 = vadd.f32 0.0, %v1408
    %v1410 = vpop.f32.mrb[0].mxu0
    %v1411 = vpop.f32.mrb[0].mxu0
    %v1412 = vadd.f32 0.0, %v1411
    %v1413 = vpop.f32.mrb[0].mxu0
    %1414 = vmatprep.mubr.bf16.mxu0 0
    %1415 = vmatmul.mubr.bf16.gmra.mrb[0].mxu0 %v1197
    %v1416 = vpop.f32.mrb[0].mxu0
    %v1417 = vadd.f32 0.0, %v1416
    %v1418 = vpop.f32.mrb[0].mxu0
    %v1419 = vpop.f32.mrb[0].mxu0
    %v1420 = vadd.f32 0.0, %v1419
    %v1421 = vpop.f32.mrb[0].mxu0
    %1422 = vmatprep.mubr.bf16.mxu0 0
    %1423 = vmatmul.mubr.bf16.gmra.mrb[0].mxu0 %v1200
    %v1424 = vpop.f32.mrb[0].mxu0
    %v1425 = vadd.f32 0.0, %v1424
    %v1426 = vpop.f32.mrb[0].mxu0
    %v1427 = vpop.f32.mrb[0].mxu0
    %v1428 = vadd.f32 0.0, %v1427
    %v1429 = vpop.f32.mrb[0].mxu0
    %1430 = vmatprep.mubr.bf16.mxu0 0
    %1431 = vmatmul.mubr.bf16.gmra.mrb[0].mxu0 %v1203
    %v1432 = vpop.f32.mrb[0].mxu0
    %v1433 = vadd.f32 0.0, %v1432
    %v1434 = vpop.f32.mrb[0].mxu0
    %v1435 = vpop.f32.mrb[0].mxu0
    %v1436 = vadd.f32 0.0, %v1435
    %v1437 = vpop.f32.mrb[0].mxu0
    %1438 = vmatprep.mubr.bf16.mxu0 0
    %1439 = vmatmul.mubr.bf16.gmra.mrb[0].mxu0 %v1206
    %v1440 = vpop.f32.mrb[0].mxu0
    %v1441 = vadd.f32 0.0, %v1440
    %v1442 = vpop.f32.mrb[0].mxu0
    %v1443 = vpop.f32.mrb[0].mxu0
    %v1444 = vadd.f32 0.0, %v1443
    %v1445 = vpop.f32.mrb[0].mxu0
    %1446 = vmatprep.mubr.bf16.mxu0 0
    %1447 = vmatmul.mubr.bf16.gmra.mrb[0].mxu0 %v1209
    %v1448 = vpop.f32.mrb[0].mxu0
    %v1449 = vadd.f32 0.0, %v1448
    %v1450 = vpop.f32.mrb[0].mxu0
    %v1451 = vpop.f32.mrb[0].mxu0
    %v1452 = vadd.f32 0.0, %v1451
    %v1453 = vpop.f32.mrb[0].mxu0
    %1454 = vmatprep.mubr.bf16.mxu0 0
    %1455 = vmatmul.mubr.bf16.gmra.mrb[0].mxu0 %v1212
    %v1456 = vpop.f32.mrb[0].mxu0
    %v1457 = vadd.f32 0.0, %v1456
    %v1458 = vpop.f32.mrb[0].mxu0
    %v1459 = vpop.f32.mrb[0].mxu0
    %v1460 = vadd.f32 0.0, %v1459
    %v1461 = vpop.f32.mrb[0].mxu0
    %1462 = vmatprep.mubr.bf16.mxu0 0
    %1463 = vmatmul.mubr.bf16.gmra.mrb[0].mxu0 %v1215
    %v1464 = vpop.f32.mrb[0].mxu0
    %v1465 = vadd.f32 0.0, %v1464
    %v1466 = vpop.f32.mrb[0].mxu0
    %v1467 = vpop.f32.mrb[0].mxu0
    %v1468 = vadd.f32 0.0, %v1467
    %v1469 = vpop.f32.mrb[0].mxu0
    %1470 = vmatprep.mubr.bf16.mxu0 0
    %1471 = vmatmul.mubr.bf16.gmra.mrb[0].mxu0 %v1218
    %v1472 = vpop.f32.mrb[0].mxu0
    %v1473 = vadd.f32 0.0, %v1472
    %v1474 = vpop.f32.mrb[0].mxu0
    %v1475 = vpop.f32.mrb[0].mxu0
    %v1476 = vadd.f32 0.0, %v1475
    %v1477 = vpop.f32.mrb[0].mxu0
    %1478 = vmatprep.mubr.bf16.mxu0 0
    %1479 = vmatmul.mubr.bf16.gmra.mrb[0].mxu0 %v1221
    %v1480 = vpop.f32.mrb[0].mxu0
    %v1481 = vadd.f32 0.0, %v1480
    %v1482 = vpop.f32.mrb[0].mxu0
    %v1483 = vpop.f32.mrb[0].mxu0
    %v1484 = vadd.f32 0.0, %v1483
    %v1485 = vpop.f32.mrb[0].mxu0
    %1486 = vmatprep.mubr.bf16.mxu0 0
    %1487 = vmatmul.mubr.bf16.gmra.mrb[0].mxu0 %v1224
    %v1488 = vpop.f32.mrb[0].mxu0
    %v1489 = vadd.f32 0.0, %v1488
    %v1490 = vpop.f32.mrb[0].mxu0
    %v1491 = vpop.f32.mrb[0].mxu0
    %v1492 = vadd.f32 0.0, %v1491
    %v1493 = vpop.f32.mrb[0].mxu0
    %1494 = vmatprep.mubr.bf16.mxu0 0
    %1495 = vmatmul.mubr.bf16.gmra.mrb[0].mxu0 %v1227
    %v1496 = vpop.f32.mrb[0].mxu0
    %v1497 = vadd.f32 0.0, %v1496
    %v1498 = vpop.f32.mrb[0].mxu0
    %v1499 = vpop.f32.mrb[0].mxu0
    %v1500 = vadd.f32 0.0, %v1499
    %v1501 = vpop.f32.mrb[0].mxu0
    %1502 = vmatprep.mubr.bf16.mxu0 0
    %1503 = vmatmul.mubr.bf16.gmra.mrb[0].mxu0 %v1230
    %v1504 = vpop.f32.mrb[0].mxu0
    %v1505 = vadd.f32 0.0, %v1504
    %v1506 = vpop.f32.mrb[0].mxu0
    %v1507 = vpop.f32.mrb[0].mxu0
    %v1508 = vadd.f32 0.0, %v1507
    %v1509 = vpop.f32.mrb[0].mxu0
    %1510 = vmatprep.mubr.bf16.mxu0 0
    %1511 = vmatmul.mubr.bf16.gmra.mrb[0].mxu0 %v1233
    %v1512 = vpop.f32.mrb[0].mxu0
    %v1513 = vadd.f32 0.0, %v1512
    %v1514 = vpop.f32.mrb[0].mxu0
    %v1515 = vpop.f32.mrb[0].mxu0
    %v1516 = vadd.f32 0.0, %v1515
    %v1517 = vpop.f32.mrb[0].mxu0
    %1518 = vmatprep.mubr.bf16.mxu0 0
    %1519 = vmatmul.mubr.bf16.gmra.mrb[0].mxu0 %v1236
    %v1520 = vpop.f32.mrb[0].mxu0
    %v1521 = vadd.f32 0.0, %v1520
    %v1522 = vpop.f32.mrb[0].mxu0
    %v1523 = vpop.f32.mrb[0].mxu0
    %v1524 = vadd.f32 0.0, %v1523
    %v1525 = vpop.f32.mrb[0].mxu0
    %1526 = vdwg.mxu0
    %v1527 = vadd.f32 %v1066, %v1273
    %v1528 = vadd.f32 %v1067, %v1276
    %v1529 = vadd.f32 %v1068, %v1281
    %v1530 = vadd.f32 %v1069, %v1284
    %v1531 = vadd.f32 %v1070, %v1289
    %v1532 = vadd.f32 %v1071, %v1292
    %v1533 = vadd.f32 %v1072, %v1297
    %v1534 = vadd.f32 %v1073, %v1300
    %v1535 = vadd.f32 %v1074, %v1305
    %v1536 = vadd.f32 %v1075, %v1308
    %v1537 = vadd.f32 %v1076, %v1313
    %v1538 = vadd.f32 %v1077, %v1316
    %v1539 = vadd.f32 %v1078, %v1321
    %v1540 = vadd.f32 %v1079, %v1324
    %v1541 = vadd.f32 %v1080, %v1329
    %v1542 = vadd.f32 %v1081, %v1332
    %v1543 = vadd.f32 %v1082, %v1337
    %v1544 = vadd.f32 %v1083, %v1340
    %v1545 = vadd.f32 %v1084, %v1345
    %v1546 = vadd.f32 %v1085, %v1348
    %v1547 = vadd.f32 %v1086, %v1353
    %v1548 = vadd.f32 %v1087, %v1356
    %v1549 = vadd.f32 %v1088, %v1361
    %v1550 = vadd.f32 %v1089, %v1364
    %v1551 = vadd.f32 %v1090, %v1369
    %v1552 = vadd.f32 %v1091, %v1372
    %v1553 = vadd.f32 %v1092, %v1377
    %v1554 = vadd.f32 %v1093, %v1380
    %v1555 = vadd.f32 %v1094, %v1385
    %v1556 = vadd.f32 %v1095, %v1388
    %v1557 = vadd.f32 %v1096, %v1393
    %v1558 = vadd.f32 %v1097, %v1396
    %v1559 = vadd.f32 %v1098, %v1401
    %v1560 = vadd.f32 %v1099, %v1404
    %v1561 = vadd.f32 %v1100, %v1409
    %v1562 = vadd.f32 %v1101, %v1412
    %v1563 = vadd.f32 %v1102, %v1417
    %v1564 = vadd.f32 %v1103, %v1420
    %v1565 = vadd.f32 %v1104, %v1425
    %v1566 = vadd.f32 %v1105, %v1428
    %v1567 = vadd.f32 %v1106, %v1433
    %v1568 = vadd.f32 %v1107, %v1436
    %v1569 = vadd.f32 %v1108, %v1441
    %v1570 = vadd.f32 %v1109, %v1444
    %v1571 = vadd.f32 %v1110, %v1449
    %v1572 = vadd.f32 %v1111, %v1452
    %v1573 = vadd.f32 %v1112, %v1457
    %v1574 = vadd.f32 %v1113, %v1460
    %v1575 = vadd.f32 %v1114, %v1465
    %v1576 = vadd.f32 %v1115, %v1468
    %v1577 = vadd.f32 %v1116, %v1473
    %v1578 = vadd.f32 %v1117, %v1476
    %v1579 = vadd.f32 %v1118, %v1481
    %v1580 = vadd.f32 %v1119, %v1484
    %v1581 = vadd.f32 %v1120, %v1489
    %v1582 = vadd.f32 %v1121, %v1492
    %v1583 = vadd.f32 %v1122, %v1497
    %v1584 = vadd.f32 %v1123, %v1500
    %v1585 = vadd.f32 %v1124, %v1505
    %v1586 = vadd.f32 %v1125, %v1508
    %v1587 = vadd.f32 %v1126, %v1513
    %v1588 = vadd.f32 %v1127, %v1516
    %v1589 = vadd.f32 %v1128, %v1521
    %v1590 = vadd.f32 %v1129, %v1524
    %1591 = vst [vmem:[#allocation2] sm:$0xff] %v1527
    %1592 = vst [vmem:[#allocation2 + $0x8] sm:$0xff] %v1528
    %1593 = vst [vmem:[#allocation2 + $0x10] sm:$0xff] %v1529
    %1594 = vst [vmem:[#allocation2 + $0x18] sm:$0xff] %v1530
    %1595 = vst [vmem:[#allocation2 + $0x20] sm:$0xff] %v1531
    %1596 = vst [vmem:[#allocation2 + $0x28] sm:$0xff] %v1532
    %1597 = vst [vmem:[#allocation2 + $0x30] sm:$0xff] %v1533
    %1598 = vst [vmem:[#allocation2 + $0x38] sm:$0xff] %v1534
    %1599 = vst [vmem:[#allocation2 + $0x40] sm:$0xff] %v1535
    %1600 = vst [vmem:[#allocation2 + $0x48] sm:$0xff] %v1536
    %1601 = vst [vmem:[#allocation2 + $0x50] sm:$0xff] %v1537
    %1602 = vst [vmem:[#allocation2 + $0x58] sm:$0xff] %v1538
    %1603 = vst [vmem:[#allocation2 + $0x60] sm:$0xff] %v1539
    %1604 = vst [vmem:[#allocation2 + $0x68] sm:$0xff] %v1540
    %1605 = vst [vmem:[#allocation2 + $0x70] sm:$0xff] %v1541
    %1606 = vst [vmem:[#allocation2 + $0x78] sm:$0xff] %v1542
    %1607 = vst [vmem:[#allocation2 + $0x80] sm:$0xff] %v1543
    %1608 = vst [vmem:[#allocation2 + $0x88] sm:$0xff] %v1544
    %1609 = vst [vmem:[#allocation2 + $0x90] sm:$0xff] %v1545
    %1610 = vst [vmem:[#allocation2 + $0x98] sm:$0xff] %v1546
    %1611 = vst [vmem:[#allocation2 + $0xa0] sm:$0xff] %v1547
    %1612 = vst [vmem:[#allocation2 + $0xa8] sm:$0xff] %v1548
    %1613 = vst [vmem:[#allocation2 + $0xb0] sm:$0xff] %v1549
    %1614 = vst [vmem:[#allocation2 + $0xb8] sm:$0xff] %v1550
    %1615 = vst [vmem:[#allocation2 + $0xc0] sm:$0xff] %v1551
    %1616 = vst [vmem:[#allocation2 + $0xc8] sm:$0xff] %v1552
    %1617 = vst [vmem:[#allocation2 + $0xd0] sm:$0xff] %v1553
    %1618 = vst [vmem:[#allocation2 + $0xd8] sm:$0xff] %v1554
    %1619 = vst [vmem:[#allocation2 + $0xe0] sm:$0xff] %v1555
    %1620 = vst [vmem:[#allocation2 + $0xe8] sm:$0xff] %v1556
    %1621 = vst [vmem:[#allocation2 + $0xf0] sm:$0xff] %v1557
    %1622 = vst [vmem:[#allocation2 + $0xf8] sm:$0xff] %v1558
    %1623 = vst [vmem:[#allocation2 + $0x100] sm:$0xff] %v1559
    %1624 = vst [vmem:[#allocation2 + $0x108] sm:$0xff] %v1560
    %1625 = vst [vmem:[#allocation2 + $0x110] sm:$0xff] %v1561
    %1626 = vst [vmem:[#allocation2 + $0x118] sm:$0xff] %v1562
    %1627 = vst [vmem:[#allocation2 + $0x120] sm:$0xff] %v1563
    %1628 = vst [vmem:[#allocation2 + $0x128] sm:$0xff] %v1564
    %1629 = vst [vmem:[#allocation2 + $0x130] sm:$0xff] %v1565
    %1630 = vst [vmem:[#allocation2 + $0x138] sm:$0xff] %v1566
    %1631 = vst [vmem:[#allocation2 + $0x140] sm:$0xff] %v1567
    %1632 = vst [vmem:[#allocation2 + $0x148] sm:$0xff] %v1568
    %1633 = vst [vmem:[#allocation2 + $0x150] sm:$0xff] %v1569
    %1634 = vst [vmem:[#allocation2 + $0x158] sm:$0xff] %v1570
    %1635 = vst [vmem:[#allocation2 + $0x160] sm:$0xff] %v1571
    %1636 = vst [vmem:[#allocation2 + $0x168] sm:$0xff] %v1572
    %1637 = vst [vmem:[#allocation2 + $0x170] sm:$0xff] %v1573
    %1638 = vst [vmem:[#allocation2 + $0x178] sm:$0xff] %v1574
    %1639 = vst [vmem:[#allocation2 + $0x180] sm:$0xff] %v1575
    %1640 = vst [vmem:[#allocation2 + $0x188] sm:$0xff] %v1576
    %1641 = vst [vmem:[#allocation2 + $0x190] sm:$0xff] %v1577
    %1642 = vst [vmem:[#allocation2 + $0x198] sm:$0xff] %v1578
    %1643 = vst [vmem:[#allocation2 + $0x1a0] sm:$0xff] %v1579
    %1644 = vst [vmem:[#allocation2 + $0x1a8] sm:$0xff] %v1580
    %1645 = vst [vmem:[#allocation2 + $0x1b0] sm:$0xff] %v1581
    %1646 = vst [vmem:[#allocation2 + $0x1b8] sm:$0xff] %v1582
    %1647 = vst [vmem:[#allocation2 + $0x1c0] sm:$0xff] %v1583
    %1648 = vst [vmem:[#allocation2 + $0x1c8] sm:$0xff] %v1584
    %1649 = vst [vmem:[#allocation2 + $0x1d0] sm:$0xff] %v1585
    %1650 = vst [vmem:[#allocation2 + $0x1d8] sm:$0xff] %v1586
    %1651 = vst [vmem:[#allocation2 + $0x1e0] sm:$0xff] %v1587
    %1652 = vst [vmem:[#allocation2 + $0x1e8] sm:$0xff] %v1588
    %1653 = vst [vmem:[#allocation2 + $0x1f0] sm:$0xff] %v1589
    %1654 = vst [vmem:[#allocation2 + $0x1f8] sm:$0xff] %v1590
    %1655 = vmatprep.subr.bf16.mxu0 0
    %1656 = vmatpush1.bf16.msra.mxu0 %v998
    %1657 = vmatprep.subr.bf16.mxu0 0
    %1658 = vmatpush1.bf16.msra.mxu0 %v999
    %1659 = vmatprep.subr.bf16.mxu0 0
    %1660 = vmatpush1.bf16.msra.mxu0 %v1000
    %1661 = vmatprep.subr.bf16.mxu0 0
    %1662 = vmatpush1.bf16.msra.mxu0 %v1001
    %1663 = vmatprep.subr.bf16.mxu0 0
    %1664 = vmatpush1.bf16.msra.mxu0 %v1002
    %1665 = vmatprep.subr.bf16.mxu0 0
    %1666 = vmatpush1.bf16.msra.mxu0 %v1003
    %1667 = vmatprep.subr.bf16.mxu0 0
    %1668 = vmatpush1.bf16.msra.mxu0 %v1004
    %1669 = vmatprep.subr.bf16.mxu0 0
    %1670 = vmatpush1.bf16.msra.mxu0 %v1005
    %1671 = vmatprep.subr.bf16.mxu0 0
    %1672 = vmatpush1.bf16.msra.mxu0 0
    %1673 = vmatprep.subr.bf16.mxu0 0
    %1674 = vmatpush1.bf16.msra.mxu0 0
    %1675 = vmatprep.subr.bf16.mxu0 0
    %1676 = vmatpush1.bf16.msra.mxu0 0
    %1677 = vmatprep.subr.bf16.mxu0 0
    %1678 = vmatpush1.bf16.msra.mxu0 0
    %1679 = vmatprep.subr.bf16.mxu0 0
    %1680 = vmatpush1.bf16.msra.mxu0 0
    %1681 = vmatprep.subr.bf16.mxu0 0
    %1682 = vmatpush1.bf16.msra.mxu0 0
    %1683 = vmatprep.subr.bf16.mxu0 0
    %1684 = vmatpush1.bf16.msra.mxu0 0
    %1685 = vmatprep.subr.bf16.mxu0 0
    %1686 = vmatpush1.bf16.msra.mxu0 0
    %1687 = vmatprep.mubr.bf16.mxu0 0
    %1688 = vmatmul.mubr.bf16.gmra.mrb[0].mxu0 %v877
    %v1689 = vpop.f32.mrb[0].mxu0
    %v1690 = vadd.f32 0.0, %v1689
    %v1691 = vpop.f32.mrb[0].mxu0
    %v1692 = vpop.f32.mrb[0].mxu0
    %v1693 = vadd.f32 0.0, %v1692
    %v1694 = vpop.f32.mrb[0].mxu0
    %1695 = vmatprep.mubr.bf16.mxu0 0
    %1696 = vmatmul.mubr.bf16.gmra.mrb[0].mxu0 %v878
    %v1697 = vpop.f32.mrb[0].mxu0
    %v1698 = vadd.f32 0.0, %v1697
    %v1699 = vpop.f32.mrb[0].mxu0
    %v1700 = vpop.f32.mrb[0].mxu0
    %v1701 = vadd.f32 0.0, %v1700
    %v1702 = vpop.f32.mrb[0].mxu0
    %1703 = vmatprep.mubr.bf16.mxu0 0
    %1704 = vmatmul.mubr.bf16.gmra.mrb[0].mxu0 %v879
    %v1705 = vpop.f32.mrb[0].mxu0
    %v1706 = vadd.f32 0.0, %v1705
    %v1707 = vpop.f32.mrb[0].mxu0
    %v1708 = vpop.f32.mrb[0].mxu0
    %v1709 = vadd.f32 0.0, %v1708
    %v1710 = vpop.f32.mrb[0].mxu0
    %1711 = vmatprep.mubr.bf16.mxu0 0
    %1712 = vmatmul.mubr.bf16.gmra.mrb[0].mxu0 %v880
    %v1713 = vpop.f32.mrb[0].mxu0
    %v1714 = vadd.f32 0.0, %v1713
    %v1715 = vpop.f32.mrb[0].mxu0
    %v1716 = vpop.f32.mrb[0].mxu0
    %v1717 = vadd.f32 0.0, %v1716
    %v1718 = vpop.f32.mrb[0].mxu0
    %1719 = vmatprep.mubr.bf16.mxu0 0
    %1720 = vmatmul.mubr.bf16.gmra.mrb[0].mxu0 %v881
    %v1721 = vpop.f32.mrb[0].mxu0
    %v1722 = vadd.f32 0.0, %v1721
    %v1723 = vpop.f32.mrb[0].mxu0
    %v1724 = vpop.f32.mrb[0].mxu0
    %v1725 = vadd.f32 0.0, %v1724
    %v1726 = vpop.f32.mrb[0].mxu0
    %1727 = vmatprep.mubr.bf16.mxu0 0
    %1728 = vmatmul.mubr.bf16.gmra.mrb[0].mxu0 %v882
    %v1729 = vpop.f32.mrb[0].mxu0
    %v1730 = vadd.f32 0.0, %v1729
    %v1731 = vpop.f32.mrb[0].mxu0
    %v1732 = vpop.f32.mrb[0].mxu0
    %v1733 = vadd.f32 0.0, %v1732
    %v1734 = vpop.f32.mrb[0].mxu0
    %1735 = vmatprep.mubr.bf16.mxu0 0
    %1736 = vmatmul.mubr.bf16.gmra.mrb[0].mxu0 %v883
    %v1737 = vpop.f32.mrb[0].mxu0
    %v1738 = vadd.f32 0.0, %v1737
    %v1739 = vpop.f32.mrb[0].mxu0
    %v1740 = vpop.f32.mrb[0].mxu0
    %v1741 = vadd.f32 0.0, %v1740
    %v1742 = vpop.f32.mrb[0].mxu0
    %1743 = vmatprep.mubr.bf16.mxu0 0
    %1744 = vmatmul.mubr.bf16.gmra.mrb[0].mxu0 %v884
    %v1745 = vpop.f32.mrb[0].mxu0
    %v1746 = vadd.f32 0.0, %v1745
    %v1747 = vpop.f32.mrb[0].mxu0
    %v1748 = vpop.f32.mrb[0].mxu0
    %v1749 = vadd.f32 0.0, %v1748
    %v1750 = vpop.f32.mrb[0].mxu0
    %1751 = vdwg.mxu0
    %v1752 = vpack.c.bf16 %v1693, %v1690
    %v1753 = vpack.c.bf16 %v1701, %v1698
    %v1754 = vpack.c.bf16 %v1709, %v1706
    %v1755 = vpack.c.bf16 %v1717, %v1714
    %v1756 = vpack.c.bf16 %v1725, %v1722
    %v1757 = vpack.c.bf16 %v1733, %v1730
    %v1758 = vpack.c.bf16 %v1741, %v1738
    %v1759 = vpack.c.bf16 %v1749, %v1746
    %1768 = vrot.lane.b32.xlu0 %v1752, 96
    %v1769 = vpop.permute.xlu0 %1768
    %1770 = vrot.lane.b32.xlu0 %v1753, 96
    %v1771 = vpop.permute.xlu0 %1770
    %1772 = vrot.lane.b32.xlu0 %v1754, 96
    %v1773 = vpop.permute.xlu0 %1772
    %1774 = vrot.lane.b32.xlu0 %v1755, 96
    %v1775 = vpop.permute.xlu0 %1774
    %1776 = vrot.lane.b32.xlu0 %v1756, 96
    %v1777 = vpop.permute.xlu0 %1776
    %1778 = vrot.lane.b32.xlu0 %v1757, 96
    %v1779 = vpop.permute.xlu0 %1778
    %1780 = vrot.lane.b32.xlu0 %v1758, 96
    %v1781 = vpop.permute.xlu0 %1780
    %1782 = vrot.lane.b32.xlu0 %v1759, 96
    %v1783 = vpop.permute.xlu0 %1782
    %1784 = vrot.lane.b32.xlu0 %v1752, 64
    %v1785 = vpop.permute.xlu0 %1784
    %1786 = vrot.lane.b32.xlu0 %v1753, 64
    %v1787 = vpop.permute.xlu0 %1786
    %1788 = vrot.lane.b32.xlu0 %v1754, 64
    %v1789 = vpop.permute.xlu0 %1788
    %1790 = vrot.lane.b32.xlu0 %v1755, 64
    %v1791 = vpop.permute.xlu0 %1790
    %1792 = vrot.lane.b32.xlu0 %v1756, 64
    %v1793 = vpop.permute.xlu0 %1792
    %1794 = vrot.lane.b32.xlu0 %v1757, 64
    %v1795 = vpop.permute.xlu0 %1794
    %1796 = vrot.lane.b32.xlu0 %v1758, 64
    %v1797 = vpop.permute.xlu0 %1796
    %1798 = vrot.lane.b32.xlu0 %v1759, 64
    %v1799 = vpop.permute.xlu0 %1798
    %1800 = vrot.lane.b32.xlu0 %v1752, 32
    %v1801 = vpop.permute.xlu0 %1800
    %1802 = vrot.lane.b32.xlu0 %v1753, 32
    %v1803 = vpop.permute.xlu0 %1802
    %1804 = vrot.lane.b32.xlu0 %v1754, 32
    %v1805 = vpop.permute.xlu0 %1804
    %1806 = vrot.lane.b32.xlu0 %v1755, 32
    %v1807 = vpop.permute.xlu0 %1806
    %1808 = vrot.lane.b32.xlu0 %v1756, 32
    %v1809 = vpop.permute.xlu0 %1808
    %1810 = vrot.lane.b32.xlu0 %v1757, 32
    %v1811 = vpop.permute.xlu0 %1810
    %1812 = vrot.lane.b32.xlu0 %v1758, 32
    %v1813 = vpop.permute.xlu0 %1812
    %1814 = vrot.lane.b32.xlu0 %v1759, 32
    %v1815 = vpop.permute.xlu0 %1814
    %v1816 = vld [vmem:[#allocation8 + $0x20] sm:$0xf]
    %v1817 = vld [vmem:[#allocation8 + $0x24] sm:$0xf]
    %v1818 = vld [vmem:[#allocation8 + $0x28] sm:$0xf]
    %v1819 = vld [vmem:[#allocation8 + $0x2c] sm:$0xf]
    %v1820 = vld [vmem:[#allocation2] sm:$0xff]
    %v1821 = vld [vmem:[#allocation2 + $0x8] sm:$0xff]
    %v1822 = vld [vmem:[#allocation2 + $0x10] sm:$0xff]
    %v1823 = vld [vmem:[#allocation2 + $0x18] sm:$0xff]
    %v1824 = vld [vmem:[#allocation2 + $0x20] sm:$0xff]
    %v1825 = vld [vmem:[#allocation2 + $0x28] sm:$0xff]
    %v1826 = vld [vmem:[#allocation2 + $0x30] sm:$0xff]
    %v1827 = vld [vmem:[#allocation2 + $0x38] sm:$0xff]
    %v1828 = vld [vmem:[#allocation2 + $0x40] sm:$0xff]
    %v1829 = vld [vmem:[#allocation2 + $0x48] sm:$0xff]
    %v1830 = vld [vmem:[#allocation2 + $0x50] sm:$0xff]
    %v1831 = vld [vmem:[#allocation2 + $0x58] sm:$0xff]
    %v1832 = vld [vmem:[#allocation2 + $0x60] sm:$0xff]
    %v1833 = vld [vmem:[#allocation2 + $0x68] sm:$0xff]
    %v1834 = vld [vmem:[#allocation2 + $0x70] sm:$0xff]
    %v1835 = vld [vmem:[#allocation2 + $0x78] sm:$0xff]
    %v1836 = vld [vmem:[#allocation2 + $0x80] sm:$0xff]
    %v1837 = vld [vmem:[#allocation2 + $0x88] sm:$0xff]
    %v1838 = vld [vmem:[#allocation2 + $0x90] sm:$0xff]
    %v1839 = vld [vmem:[#allocation2 + $0x98] sm:$0xff]
    %v1840 = vld [vmem:[#allocation2 + $0xa0] sm:$0xff]
    %v1841 = vld [vmem:[#allocation2 + $0xa8] sm:$0xff]
    %v1842 = vld [vmem:[#allocation2 + $0xb0] sm:$0xff]
    %v1843 = vld [vmem:[#allocation2 + $0xb8] sm:$0xff]
    %v1844 = vld [vmem:[#allocation2 + $0xc0] sm:$0xff]
    %v1845 = vld [vmem:[#allocation2 + $0xc8] sm:$0xff]
    %v1846 = vld [vmem:[#allocation2 + $0xd0] sm:$0xff]
    %v1847 = vld [vmem:[#allocation2 + $0xd8] sm:$0xff]
    %v1848 = vld [vmem:[#allocation2 + $0xe0] sm:$0xff]
    %v1849 = vld [vmem:[#allocation2 + $0xe8] sm:$0xff]
    %v1850 = vld [vmem:[#allocation2 + $0xf0] sm:$0xff]
    %v1851 = vld [vmem:[#allocation2 + $0xf8] sm:$0xff]
    %v1852 = vld [vmem:[#allocation2 + $0x100] sm:$0xff]
    %v1853 = vld [vmem:[#allocation2 + $0x108] sm:$0xff]
    %v1854 = vld [vmem:[#allocation2 + $0x110] sm:$0xff]
    %v1855 = vld [vmem:[#allocation2 + $0x118] sm:$0xff]
    %v1856 = vld [vmem:[#allocation2 + $0x120] sm:$0xff]
    %v1857 = vld [vmem:[#allocation2 + $0x128] sm:$0xff]
    %v1858 = vld [vmem:[#allocation2 + $0x130] sm:$0xff]
    %v1859 = vld [vmem:[#allocation2 + $0x138] sm:$0xff]
    %v1860 = vld [vmem:[#allocation2 + $0x140] sm:$0xff]
    %v1861 = vld [vmem:[#allocation2 + $0x148] sm:$0xff]
    %v1862 = vld [vmem:[#allocation2 + $0x150] sm:$0xff]
    %v1863 = vld [vmem:[#allocation2 + $0x158] sm:$0xff]
    %v1864 = vld [vmem:[#allocation2 + $0x160] sm:$0xff]
    %v1865 = vld [vmem:[#allocation2 + $0x168] sm:$0xff]
    %v1866 = vld [vmem:[#allocation2 + $0x170] sm:$0xff]
    %v1867 = vld [vmem:[#allocation2 + $0x178] sm:$0xff]
    %v1868 = vld [vmem:[#allocation2 + $0x180] sm:$0xff]
    %v1869 = vld [vmem:[#allocation2 + $0x188] sm:$0xff]
    %v1870 = vld [vmem:[#allocation2 + $0x190] sm:$0xff]
    %v1871 = vld [vmem:[#allocation2 + $0x198] sm:$0xff]
    %v1872 = vld [vmem:[#allocation2 + $0x1a0] sm:$0xff]
    %v1873 = vld [vmem:[#allocation2 + $0x1a8] sm:$0xff]
    %v1874 = vld [vmem:[#allocation2 + $0x1b0] sm:$0xff]
    %v1875 = vld [vmem:[#allocation2 + $0x1b8] sm:$0xff]
    %v1876 = vld [vmem:[#allocation2 + $0x1c0] sm:$0xff]
    %v1877 = vld [vmem:[#allocation2 + $0x1c8] sm:$0xff]
    %v1878 = vld [vmem:[#allocation2 + $0x1d0] sm:$0xff]
    %v1879 = vld [vmem:[#allocation2 + $0x1d8] sm:$0xff]
    %v1880 = vld [vmem:[#allocation2 + $0x1e0] sm:$0xff]
    %v1881 = vld [vmem:[#allocation2 + $0x1e8] sm:$0xff]
    %v1882 = vld [vmem:[#allocation2 + $0x1f0] sm:$0xff]
    %v1883 = vld [vmem:[#allocation2 + $0x1f8] sm:$0xff]
    %v1888 = vunpack.c.l.b16 %v1816
    %v1889 = vunpack.c.l.b16 %v1817
    %v1890 = vunpack.c.l.b16 %v1818
    %v1891 = vunpack.c.l.b16 %v1819
    %v1892 = vpack.c.b16 %v1889, %v1888
    %v1893 = vpack.c.b16 %v1891, %v1890
    %v1897 = vsel %vm331, %v1752, 0
    %v1900 = vsel %vm331, %v1753, 0
    %v1903 = vsel %vm331, %v1754, 0
    %v1906 = vsel %vm331, %v1755, 0
    %v1909 = vsel %vm331, %v1756, 0
    %v1912 = vsel %vm331, %v1757, 0
    %v1915 = vsel %vm331, %v1758, 0
    %v1918 = vsel %vm331, %v1759, 0
    %v1921 = vsel %vm331, %v1769, 0
    %v1924 = vsel %vm331, %v1771, 0
    %v1927 = vsel %vm331, %v1773, 0
    %v1930 = vsel %vm331, %v1775, 0
    %v1933 = vsel %vm331, %v1777, 0
    %v1936 = vsel %vm331, %v1779, 0
    %v1939 = vsel %vm331, %v1781, 0
    %v1942 = vsel %vm331, %v1783, 0
    %v1945 = vsel %vm331, %v1785, 0
    %v1948 = vsel %vm331, %v1787, 0
    %v1951 = vsel %vm331, %v1789, 0
    %v1954 = vsel %vm331, %v1791, 0
    %v1957 = vsel %vm331, %v1793, 0
    %v1960 = vsel %vm331, %v1795, 0
    %v1963 = vsel %vm331, %v1797, 0
    %v1966 = vsel %vm331, %v1799, 0
    %v1969 = vsel %vm331, %v1801, 0
    %v1972 = vsel %vm331, %v1803, 0
    %v1975 = vsel %vm331, %v1805, 0
    %v1978 = vsel %vm331, %v1807, 0
    %v1981 = vsel %vm331, %v1809, 0
    %v1984 = vsel %vm331, %v1811, 0
    %v1987 = vsel %vm331, %v1813, 0
    %v1990 = vsel %vm331, %v1815, 0
    %1992 = vmatprep.subr.bf16.mxu0 0
    %1993 = vmatpush1.bf16.msra.mxu0 %v1892
    %1994 = vmatprep.subr.bf16.mxu0 0
    %1995 = vmatpush1.bf16.msra.mxu0 %v1893
    %1996 = vmatprep.subr.bf16.mxu0 0
    %1997 = vmatpush1.bf16.msra.mxu0 0
    %1998 = vmatprep.subr.bf16.mxu0 0
    %1999 = vmatpush1.bf16.msra.mxu0 0
    %2000 = vmatprep.subr.bf16.mxu0 0
    %2001 = vmatpush1.bf16.msra.mxu0 0
    %2002 = vmatprep.subr.bf16.mxu0 0
    %2003 = vmatpush1.bf16.msra.mxu0 0
    %2004 = vmatprep.subr.bf16.mxu0 0
    %2005 = vmatpush1.bf16.msra.mxu0 0
    %2006 = vmatprep.subr.bf16.mxu0 0
    %2007 = vmatpush1.bf16.msra.mxu0 0
    %2008 = vmatprep.subr.bf16.mxu0 0
    %2009 = vmatpush1.bf16.msra.mxu0 0
    %2010 = vmatprep.subr.bf16.mxu0 0
    %2011 = vmatpush1.bf16.msra.mxu0 0
    %2012 = vmatprep.subr.bf16.mxu0 0
    %2013 = vmatpush1.bf16.msra.mxu0 0
    %2014 = vmatprep.subr.bf16.mxu0 0
    %2015 = vmatpush1.bf16.msra.mxu0 0
    %2016 = vmatprep.subr.bf16.mxu0 0
    %2017 = vmatpush1.bf16.msra.mxu0 0
    %2018 = vmatprep.subr.bf16.mxu0 0
    %2019 = vmatpush1.bf16.msra.mxu0 0
    %2020 = vmatprep.subr.bf16.mxu0 0
    %2021 = vmatpush1.bf16.msra.mxu0 0
    %2022 = vmatprep.subr.bf16.mxu0 0
    %2023 = vmatpush1.bf16.msra.mxu0 0
    %2024 = vmatprep.mubr.bf16.mxu0 0
    %2025 = vmatmul.mubr.bf16.gmra.mrb[0].mxu0 %v1897
    %v2026 = vpop.f32.mrb[0].mxu0
    %v2027 = vadd.f32 0.0, %v2026
    %v2028 = vpop.f32.mrb[0].mxu0
    %v2029 = vpop.f32.mrb[0].mxu0
    %v2030 = vadd.f32 0.0, %v2029
    %v2031 = vpop.f32.mrb[0].mxu0
    %2032 = vmatprep.mubr.bf16.mxu0 0
    %2033 = vmatmul.mubr.bf16.gmra.mrb[0].mxu0 %v1900
    %v2034 = vpop.f32.mrb[0].mxu0
    %v2035 = vadd.f32 0.0, %v2034
    %v2036 = vpop.f32.mrb[0].mxu0
    %v2037 = vpop.f32.mrb[0].mxu0
    %v2038 = vadd.f32 0.0, %v2037
    %v2039 = vpop.f32.mrb[0].mxu0
    %2040 = vmatprep.mubr.bf16.mxu0 0
    %2041 = vmatmul.mubr.bf16.gmra.mrb[0].mxu0 %v1903
    %v2042 = vpop.f32.mrb[0].mxu0
    %v2043 = vadd.f32 0.0, %v2042
    %v2044 = vpop.f32.mrb[0].mxu0
    %v2045 = vpop.f32.mrb[0].mxu0
    %v2046 = vadd.f32 0.0, %v2045
    %v2047 = vpop.f32.mrb[0].mxu0
    %2048 = vmatprep.mubr.bf16.mxu0 0
    %2049 = vmatmul.mubr.bf16.gmra.mrb[0].mxu0 %v1906
    %v2050 = vpop.f32.mrb[0].mxu0
    %v2051 = vadd.f32 0.0, %v2050
    %v2052 = vpop.f32.mrb[0].mxu0
    %v2053 = vpop.f32.mrb[0].mxu0
    %v2054 = vadd.f32 0.0, %v2053
    %v2055 = vpop.f32.mrb[0].mxu0
    %2056 = vmatprep.mubr.bf16.mxu0 0
    %2057 = vmatmul.mubr.bf16.gmra.mrb[0].mxu0 %v1909
    %v2058 = vpop.f32.mrb[0].mxu0
    %v2059 = vadd.f32 0.0, %v2058
    %v2060 = vpop.f32.mrb[0].mxu0
    %v2061 = vpop.f32.mrb[0].mxu0
    %v2062 = vadd.f32 0.0, %v2061
    %v2063 = vpop.f32.mrb[0].mxu0
    %2064 = vmatprep.mubr.bf16.mxu0 0
    %2065 = vmatmul.mubr.bf16.gmra.mrb[0].mxu0 %v1912
    %v2066 = vpop.f32.mrb[0].mxu0
    %v2067 = vadd.f32 0.0, %v2066
    %v2068 = vpop.f32.mrb[0].mxu0
    %v2069 = vpop.f32.mrb[0].mxu0
    %v2070 = vadd.f32 0.0, %v2069
    %v2071 = vpop.f32.mrb[0].mxu0
    %2072 = vmatprep.mubr.bf16.mxu0 0
    %2073 = vmatmul.mubr.bf16.gmra.mrb[0].mxu0 %v1915
    %v2074 = vpop.f32.mrb[0].mxu0
    %v2075 = vadd.f32 0.0, %v2074
    %v2076 = vpop.f32.mrb[0].mxu0
    %v2077 = vpop.f32.mrb[0].mxu0
    %v2078 = vadd.f32 0.0, %v2077
    %v2079 = vpop.f32.mrb[0].mxu0
    %2080 = vmatprep.mubr.bf16.mxu0 0
    %2081 = vmatmul.mubr.bf16.gmra.mrb[0].mxu0 %v1918
    %v2082 = vpop.f32.mrb[0].mxu0
    %v2083 = vadd.f32 0.0, %v2082
    %v2084 = vpop.f32.mrb[0].mxu0
    %v2085 = vpop.f32.mrb[0].mxu0
    %v2086 = vadd.f32 0.0, %v2085
    %v2087 = vpop.f32.mrb[0].mxu0
    %2088 = vmatprep.mubr.bf16.mxu0 0
    %2089 = vmatmul.mubr.bf16.gmra.mrb[0].mxu0 %v1921
    %v2090 = vpop.f32.mrb[0].mxu0
    %v2091 = vadd.f32 0.0, %v2090
    %v2092 = vpop.f32.mrb[0].mxu0
    %v2093 = vpop.f32.mrb[0].mxu0
    %v2094 = vadd.f32 0.0, %v2093
    %v2095 = vpop.f32.mrb[0].mxu0
    %2096 = vmatprep.mubr.bf16.mxu0 0
    %2097 = vmatmul.mubr.bf16.gmra.mrb[0].mxu0 %v1924
    %v2098 = vpop.f32.mrb[0].mxu0
    %v2099 = vadd.f32 0.0, %v2098
    %v2100 = vpop.f32.mrb[0].mxu0
    %v2101 = vpop.f32.mrb[0].mxu0
    %v2102 = vadd.f32 0.0, %v2101
    %v2103 = vpop.f32.mrb[0].mxu0
    %2104 = vmatprep.mubr.bf16.mxu0 0
    %2105 = vmatmul.mubr.bf16.gmra.mrb[0].mxu0 %v1927
    %v2106 = vpop.f32.mrb[0].mxu0
    %v2107 = vadd.f32 0.0, %v2106
    %v2108 = vpop.f32.mrb[0].mxu0
    %v2109 = vpop.f32.mrb[0].mxu0
    %v2110 = vadd.f32 0.0, %v2109
    %v2111 = vpop.f32.mrb[0].mxu0
    %2112 = vmatprep.mubr.bf16.mxu0 0
    %2113 = vmatmul.mubr.bf16.gmra.mrb[0].mxu0 %v1930
    %v2114 = vpop.f32.mrb[0].mxu0
    %v2115 = vadd.f32 0.0, %v2114
    %v2116 = vpop.f32.mrb[0].mxu0
    %v2117 = vpop.f32.mrb[0].mxu0
    %v2118 = vadd.f32 0.0, %v2117
    %v2119 = vpop.f32.mrb[0].mxu0
    %2120 = vmatprep.mubr.bf16.mxu0 0
    %2121 = vmatmul.mubr.bf16.gmra.mrb[0].mxu0 %v1933
    %v2122 = vpop.f32.mrb[0].mxu0
    %v2123 = vadd.f32 0.0, %v2122
    %v2124 = vpop.f32.mrb[0].mxu0
    %v2125 = vpop.f32.mrb[0].mxu0
    %v2126 = vadd.f32 0.0, %v2125
    %v2127 = vpop.f32.mrb[0].mxu0
    %2128 = vmatprep.mubr.bf16.mxu0 0
    %2129 = vmatmul.mubr.bf16.gmra.mrb[0].mxu0 %v1936
    %v2130 = vpop.f32.mrb[0].mxu0
    %v2131 = vadd.f32 0.0, %v2130
    %v2132 = vpop.f32.mrb[0].mxu0
    %v2133 = vpop.f32.mrb[0].mxu0
    %v2134 = vadd.f32 0.0, %v2133
    %v2135 = vpop.f32.mrb[0].mxu0
    %2136 = vmatprep.mubr.bf16.mxu0 0
    %2137 = vmatmul.mubr.bf16.gmra.mrb[0].mxu0 %v1939
    %v2138 = vpop.f32.mrb[0].mxu0
    %v2139 = vadd.f32 0.0, %v2138
    %v2140 = vpop.f32.mrb[0].mxu0
    %v2141 = vpop.f32.mrb[0].mxu0
    %v2142 = vadd.f32 0.0, %v2141
    %v2143 = vpop.f32.mrb[0].mxu0
    %2144 = vmatprep.mubr.bf16.mxu0 0
    %2145 = vmatmul.mubr.bf16.gmra.mrb[0].mxu0 %v1942
    %v2146 = vpop.f32.mrb[0].mxu0
    %v2147 = vadd.f32 0.0, %v2146
    %v2148 = vpop.f32.mrb[0].mxu0
    %v2149 = vpop.f32.mrb[0].mxu0
    %v2150 = vadd.f32 0.0, %v2149
    %v2151 = vpop.f32.mrb[0].mxu0
    %2152 = vmatprep.mubr.bf16.mxu0 0
    %2153 = vmatmul.mubr.bf16.gmra.mrb[0].mxu0 %v1945
    %v2154 = vpop.f32.mrb[0].mxu0
    %v2155 = vadd.f32 0.0, %v2154
    %v2156 = vpop.f32.mrb[0].mxu0
    %v2157 = vpop.f32.mrb[0].mxu0
    %v2158 = vadd.f32 0.0, %v2157
    %v2159 = vpop.f32.mrb[0].mxu0
    %2160 = vmatprep.mubr.bf16.mxu0 0
    %2161 = vmatmul.mubr.bf16.gmra.mrb[0].mxu0 %v1948
    %v2162 = vpop.f32.mrb[0].mxu0
    %v2163 = vadd.f32 0.0, %v2162
    %v2164 = vpop.f32.mrb[0].mxu0
    %v2165 = vpop.f32.mrb[0].mxu0
    %v2166 = vadd.f32 0.0, %v2165
    %v2167 = vpop.f32.mrb[0].mxu0
    %2168 = vmatprep.mubr.bf16.mxu0 0
    %2169 = vmatmul.mubr.bf16.gmra.mrb[0].mxu0 %v1951
    %v2170 = vpop.f32.mrb[0].mxu0
    %v2171 = vadd.f32 0.0, %v2170
    %v2172 = vpop.f32.mrb[0].mxu0
    %v2173 = vpop.f32.mrb[0].mxu0
    %v2174 = vadd.f32 0.0, %v2173
    %v2175 = vpop.f32.mrb[0].mxu0
    %2176 = vmatprep.mubr.bf16.mxu0 0
    %2177 = vmatmul.mubr.bf16.gmra.mrb[0].mxu0 %v1954
    %v2178 = vpop.f32.mrb[0].mxu0
    %v2179 = vadd.f32 0.0, %v2178
    %v2180 = vpop.f32.mrb[0].mxu0
    %v2181 = vpop.f32.mrb[0].mxu0
    %v2182 = vadd.f32 0.0, %v2181
    %v2183 = vpop.f32.mrb[0].mxu0
    %2184 = vmatprep.mubr.bf16.mxu0 0
    %2185 = vmatmul.mubr.bf16.gmra.mrb[0].mxu0 %v1957
    %v2186 = vpop.f32.mrb[0].mxu0
    %v2187 = vadd.f32 0.0, %v2186
    %v2188 = vpop.f32.mrb[0].mxu0
    %v2189 = vpop.f32.mrb[0].mxu0
    %v2190 = vadd.f32 0.0, %v2189
    %v2191 = vpop.f32.mrb[0].mxu0
    %2192 = vmatprep.mubr.bf16.mxu0 0
    %2193 = vmatmul.mubr.bf16.gmra.mrb[0].mxu0 %v1960
    %v2194 = vpop.f32.mrb[0].mxu0
    %v2195 = vadd.f32 0.0, %v2194
    %v2196 = vpop.f32.mrb[0].mxu0
    %v2197 = vpop.f32.mrb[0].mxu0
    %v2198 = vadd.f32 0.0, %v2197
    %v2199 = vpop.f32.mrb[0].mxu0
    %2200 = vmatprep.mubr.bf16.mxu0 0
    %2201 = vmatmul.mubr.bf16.gmra.mrb[0].mxu0 %v1963
    %v2202 = vpop.f32.mrb[0].mxu0
    %v2203 = vadd.f32 0.0, %v2202
    %v2204 = vpop.f32.mrb[0].mxu0
    %v2205 = vpop.f32.mrb[0].mxu0
    %v2206 = vadd.f32 0.0, %v2205
    %v2207 = vpop.f32.mrb[0].mxu0
    %2208 = vmatprep.mubr.bf16.mxu0 0
    %2209 = vmatmul.mubr.bf16.gmra.mrb[0].mxu0 %v1966
    %v2210 = vpop.f32.mrb[0].mxu0
    %v2211 = vadd.f32 0.0, %v2210
    %v2212 = vpop.f32.mrb[0].mxu0
    %v2213 = vpop.f32.mrb[0].mxu0
    %v2214 = vadd.f32 0.0, %v2213
    %v2215 = vpop.f32.mrb[0].mxu0
    %2216 = vmatprep.mubr.bf16.mxu0 0
    %2217 = vmatmul.mubr.bf16.gmra.mrb[0].mxu0 %v1969
    %v2218 = vpop.f32.mrb[0].mxu0
    %v2219 = vadd.f32 0.0, %v2218
    %v2220 = vpop.f32.mrb[0].mxu0
    %v2221 = vpop.f32.mrb[0].mxu0
    %v2222 = vadd.f32 0.0, %v2221
    %v2223 = vpop.f32.mrb[0].mxu0
    %2224 = vmatprep.mubr.bf16.mxu0 0
    %2225 = vmatmul.mubr.bf16.gmra.mrb[0].mxu0 %v1972
    %v2226 = vpop.f32.mrb[0].mxu0
    %v2227 = vadd.f32 0.0, %v2226
    %v2228 = vpop.f32.mrb[0].mxu0
    %v2229 = vpop.f32.mrb[0].mxu0
    %v2230 = vadd.f32 0.0, %v2229
    %v2231 = vpop.f32.mrb[0].mxu0
    %2232 = vmatprep.mubr.bf16.mxu0 0
    %2233 = vmatmul.mubr.bf16.gmra.mrb[0].mxu0 %v1975
    %v2234 = vpop.f32.mrb[0].mxu0
    %v2235 = vadd.f32 0.0, %v2234
    %v2236 = vpop.f32.mrb[0].mxu0
    %v2237 = vpop.f32.mrb[0].mxu0
    %v2238 = vadd.f32 0.0, %v2237
    %v2239 = vpop.f32.mrb[0].mxu0
    %2240 = vmatprep.mubr.bf16.mxu0 0
    %2241 = vmatmul.mubr.bf16.gmra.mrb[0].mxu0 %v1978
    %v2242 = vpop.f32.mrb[0].mxu0
    %v2243 = vadd.f32 0.0, %v2242
    %v2244 = vpop.f32.mrb[0].mxu0
    %v2245 = vpop.f32.mrb[0].mxu0
    %v2246 = vadd.f32 0.0, %v2245
    %v2247 = vpop.f32.mrb[0].mxu0
    %2248 = vmatprep.mubr.bf16.mxu0 0
    %2249 = vmatmul.mubr.bf16.gmra.mrb[0].mxu0 %v1981
    %v2250 = vpop.f32.mrb[0].mxu0
    %v2251 = vadd.f32 0.0, %v2250
    %v2252 = vpop.f32.mrb[0].mxu0
    %v2253 = vpop.f32.mrb[0].mxu0
    %v2254 = vadd.f32 0.0, %v2253
    %v2255 = vpop.f32.mrb[0].mxu0
    %2256 = vmatprep.mubr.bf16.mxu0 0
    %2257 = vmatmul.mubr.bf16.gmra.mrb[0].mxu0 %v1984
    %v2258 = vpop.f32.mrb[0].mxu0
    %v2259 = vadd.f32 0.0, %v2258
    %v2260 = vpop.f32.mrb[0].mxu0
    %v2261 = vpop.f32.mrb[0].mxu0
    %v2262 = vadd.f32 0.0, %v2261
    %v2263 = vpop.f32.mrb[0].mxu0
    %2264 = vmatprep.mubr.bf16.mxu0 0
    %2265 = vmatmul.mubr.bf16.gmra.mrb[0].mxu0 %v1987
    %v2266 = vpop.f32.mrb[0].mxu0
    %v2267 = vadd.f32 0.0, %v2266
    %v2268 = vpop.f32.mrb[0].mxu0
    %v2269 = vpop.f32.mrb[0].mxu0
    %v2270 = vadd.f32 0.0, %v2269
    %v2271 = vpop.f32.mrb[0].mxu0
    %2272 = vmatprep.mubr.bf16.mxu0 0
    %2273 = vmatmul.mubr.bf16.gmra.mrb[0].mxu0 %v1990
    %v2274 = vpop.f32.mrb[0].mxu0
    %v2275 = vadd.f32 0.0, %v2274
    %v2276 = vpop.f32.mrb[0].mxu0
    %v2277 = vpop.f32.mrb[0].mxu0
    %v2278 = vadd.f32 0.0, %v2277
    %v2279 = vpop.f32.mrb[0].mxu0
    %2280 = vdwg.mxu0
    %v2281 = vadd.f32 %v1820, %v2027
    %v2282 = vadd.f32 %v1821, %v2030
    %v2283 = vadd.f32 %v1822, %v2035
    %v2284 = vadd.f32 %v1823, %v2038
    %v2285 = vadd.f32 %v1824, %v2043
    %v2286 = vadd.f32 %v1825, %v2046
    %v2287 = vadd.f32 %v1826, %v2051
    %v2288 = vadd.f32 %v1827, %v2054
    %v2289 = vadd.f32 %v1828, %v2059
    %v2290 = vadd.f32 %v1829, %v2062
    %v2291 = vadd.f32 %v1830, %v2067
    %v2292 = vadd.f32 %v1831, %v2070
    %v2293 = vadd.f32 %v1832, %v2075
    %v2294 = vadd.f32 %v1833, %v2078
    %v2295 = vadd.f32 %v1834, %v2083
    %v2296 = vadd.f32 %v1835, %v2086
    %v2297 = vadd.f32 %v1836, %v2091
    %v2298 = vadd.f32 %v1837, %v2094
    %v2299 = vadd.f32 %v1838, %v2099
    %v2300 = vadd.f32 %v1839, %v2102
    %v2301 = vadd.f32 %v1840, %v2107
    %v2302 = vadd.f32 %v1841, %v2110
    %v2303 = vadd.f32 %v1842, %v2115
    %v2304 = vadd.f32 %v1843, %v2118
    %v2305 = vadd.f32 %v1844, %v2123
    %v2306 = vadd.f32 %v1845, %v2126
    %v2307 = vadd.f32 %v1846, %v2131
    %v2308 = vadd.f32 %v1847, %v2134
    %v2309 = vadd.f32 %v1848, %v2139
    %v2310 = vadd.f32 %v1849, %v2142
    %v2311 = vadd.f32 %v1850, %v2147
    %v2312 = vadd.f32 %v1851, %v2150
    %v2313 = vadd.f32 %v1852, %v2155
    %v2314 = vadd.f32 %v1853, %v2158
    %v2315 = vadd.f32 %v1854, %v2163
    %v2316 = vadd.f32 %v1855, %v2166
    %v2317 = vadd.f32 %v1856, %v2171
    %v2318 = vadd.f32 %v1857, %v2174
    %v2319 = vadd.f32 %v1858, %v2179
    %v2320 = vadd.f32 %v1859, %v2182
    %v2321 = vadd.f32 %v1860, %v2187
    %v2322 = vadd.f32 %v1861, %v2190
    %v2323 = vadd.f32 %v1862, %v2195
    %v2324 = vadd.f32 %v1863, %v2198
    %v2325 = vadd.f32 %v1864, %v2203
    %v2326 = vadd.f32 %v1865, %v2206
    %v2327 = vadd.f32 %v1866, %v2211
    %v2328 = vadd.f32 %v1867, %v2214
    %v2329 = vadd.f32 %v1868, %v2219
    %v2330 = vadd.f32 %v1869, %v2222
    %v2331 = vadd.f32 %v1870, %v2227
    %v2332 = vadd.f32 %v1871, %v2230
    %v2333 = vadd.f32 %v1872, %v2235
    %v2334 = vadd.f32 %v1873, %v2238
    %v2335 = vadd.f32 %v1874, %v2243
    %v2336 = vadd.f32 %v1875, %v2246
    %v2337 = vadd.f32 %v1876, %v2251
    %v2338 = vadd.f32 %v1877, %v2254
    %v2339 = vadd.f32 %v1878, %v2259
    %v2340 = vadd.f32 %v1879, %v2262
    %v2341 = vadd.f32 %v1880, %v2267
    %v2342 = vadd.f32 %v1881, %v2270
    %v2343 = vadd.f32 %v1882, %v2275
    %v2344 = vadd.f32 %v1883, %v2278
    %2345 = vst [vmem:[#allocation2] sm:$0xff] %v2281
    %2346 = vst [vmem:[#allocation2 + $0x8] sm:$0xff] %v2282
    %2347 = vst [vmem:[#allocation2 + $0x10] sm:$0xff] %v2283
    %2348 = vst [vmem:[#allocation2 + $0x18] sm:$0xff] %v2284
    %2349 = vst [vmem:[#allocation2 + $0x20] sm:$0xff] %v2285
    %2350 = vst [vmem:[#allocation2 + $0x28] sm:$0xff] %v2286
    %2351 = vst [vmem:[#allocation2 + $0x30] sm:$0xff] %v2287
    %2352 = vst [vmem:[#allocation2 + $0x38] sm:$0xff] %v2288
    %2353 = vst [vmem:[#allocation2 + $0x40] sm:$0xff] %v2289
    %2354 = vst [vmem:[#allocation2 + $0x48] sm:$0xff] %v2290
    %2355 = vst [vmem:[#allocation2 + $0x50] sm:$0xff] %v2291
    %2356 = vst [vmem:[#allocation2 + $0x58] sm:$0xff] %v2292
    %2357 = vst [vmem:[#allocation2 + $0x60] sm:$0xff] %v2293
    %2358 = vst [vmem:[#allocation2 + $0x68] sm:$0xff] %v2294
    %2359 = vst [vmem:[#allocation2 + $0x70] sm:$0xff] %v2295
    %2360 = vst [vmem:[#allocation2 + $0x78] sm:$0xff] %v2296
    %2361 = vst [vmem:[#allocation2 + $0x80] sm:$0xff] %v2297
    %2362 = vst [vmem:[#allocation2 + $0x88] sm:$0xff] %v2298
    %2363 = vst [vmem:[#allocation2 + $0x90] sm:$0xff] %v2299
    %2364 = vst [vmem:[#allocation2 + $0x98] sm:$0xff] %v2300
    %2365 = vst [vmem:[#allocation2 + $0xa0] sm:$0xff] %v2301
    %2366 = vst [vmem:[#allocation2 + $0xa8] sm:$0xff] %v2302
    %2367 = vst [vmem:[#allocation2 + $0xb0] sm:$0xff] %v2303
    %2368 = vst [vmem:[#allocation2 + $0xb8] sm:$0xff] %v2304
    %2369 = vst [vmem:[#allocation2 + $0xc0] sm:$0xff] %v2305
    %2370 = vst [vmem:[#allocation2 + $0xc8] sm:$0xff] %v2306
    %2371 = vst [vmem:[#allocation2 + $0xd0] sm:$0xff] %v2307
    %2372 = vst [vmem:[#allocation2 + $0xd8] sm:$0xff] %v2308
    %2373 = vst [vmem:[#allocation2 + $0xe0] sm:$0xff] %v2309
    %2374 = vst [vmem:[#allocation2 + $0xe8] sm:$0xff] %v2310
    %2375 = vst [vmem:[#allocation2 + $0xf0] sm:$0xff] %v2311
    %2376 = vst [vmem:[#allocation2 + $0xf8] sm:$0xff] %v2312
    %2377 = vst [vmem:[#allocation2 + $0x100] sm:$0xff] %v2313
    %2378 = vst [vmem:[#allocation2 + $0x108] sm:$0xff] %v2314
    %2379 = vst [vmem:[#allocation2 + $0x110] sm:$0xff] %v2315
    %2380 = vst [vmem:[#allocation2 + $0x118] sm:$0xff] %v2316
    %2381 = vst [vmem:[#allocation2 + $0x120] sm:$0xff] %v2317
    %2382 = vst [vmem:[#allocation2 + $0x128] sm:$0xff] %v2318
    %2383 = vst [vmem:[#allocation2 + $0x130] sm:$0xff] %v2319
    %2384 = vst [vmem:[#allocation2 + $0x138] sm:$0xff] %v2320
    %2385 = vst [vmem:[#allocation2 + $0x140] sm:$0xff] %v2321
    %2386 = vst [vmem:[#allocation2 + $0x148] sm:$0xff] %v2322
    %2387 = vst [vmem:[#allocation2 + $0x150] sm:$0xff] %v2323
    %2388 = vst [vmem:[#allocation2 + $0x158] sm:$0xff] %v2324
    %2389 = vst [vmem:[#allocation2 + $0x160] sm:$0xff] %v2325
    %2390 = vst [vmem:[#allocation2 + $0x168] sm:$0xff] %v2326
    %2391 = vst [vmem:[#allocation2 + $0x170] sm:$0xff] %v2327
    %2392 = vst [vmem:[#allocation2 + $0x178] sm:$0xff] %v2328
    %2393 = vst [vmem:[#allocation2 + $0x180] sm:$0xff] %v2329
    %2394 = vst [vmem:[#allocation2 + $0x188] sm:$0xff] %v2330
    %2395 = vst [vmem:[#allocation2 + $0x190] sm:$0xff] %v2331
    %2396 = vst [vmem:[#allocation2 + $0x198] sm:$0xff] %v2332
    %2397 = vst [vmem:[#allocation2 + $0x1a0] sm:$0xff] %v2333
    %2398 = vst [vmem:[#allocation2 + $0x1a8] sm:$0xff] %v2334
    %2399 = vst [vmem:[#allocation2 + $0x1b0] sm:$0xff] %v2335
    %2400 = vst [vmem:[#allocation2 + $0x1b8] sm:$0xff] %v2336
    %2401 = vst [vmem:[#allocation2 + $0x1c0] sm:$0xff] %v2337
    %2402 = vst [vmem:[#allocation2 + $0x1c8] sm:$0xff] %v2338
    %2403 = vst [vmem:[#allocation2 + $0x1d0] sm:$0xff] %v2339
    %2404 = vst [vmem:[#allocation2 + $0x1d8] sm:$0xff] %v2340
    %2405 = vst [vmem:[#allocation2 + $0x1e0] sm:$0xff] %v2341
    %2406 = vst [vmem:[#allocation2 + $0x1e8] sm:$0xff] %v2342
    %2407 = vst [vmem:[#allocation2 + $0x1f0] sm:$0xff] %v2343
    %2408 = vst [vmem:[#allocation2 + $0x1f8] sm:$0xff] %v2344
    %v2409 = vld [vmem:[#allocation2] sm:$0xff]
    %v2410 = vld [vmem:[#allocation2 + $0x8] sm:$0xff]
    %v2411 = vld [vmem:[#allocation2 + $0x10] sm:$0xff]
    %v2412 = vld [vmem:[#allocation2 + $0x18] sm:$0xff]
    %v2413 = vld [vmem:[#allocation2 + $0x20] sm:$0xff]
    %v2414 = vld [vmem:[#allocation2 + $0x28] sm:$0xff]
    %v2415 = vld [vmem:[#allocation2 + $0x30] sm:$0xff]
    %v2416 = vld [vmem:[#allocation2 + $0x38] sm:$0xff]
    %v2417 = vld [vmem:[#allocation2 + $0x40] sm:$0xff]
    %v2418 = vld [vmem:[#allocation2 + $0x48] sm:$0xff]
    %v2419 = vld [vmem:[#allocation2 + $0x50] sm:$0xff]
    %v2420 = vld [vmem:[#allocation2 + $0x58] sm:$0xff]
    %v2421 = vld [vmem:[#allocation2 + $0x60] sm:$0xff]
    %v2422 = vld [vmem:[#allocation2 + $0x68] sm:$0xff]
    %v2423 = vld [vmem:[#allocation2 + $0x70] sm:$0xff]
    %v2424 = vld [vmem:[#allocation2 + $0x78] sm:$0xff]
    %v2425 = vld [vmem:[#allocation2 + $0x80] sm:$0xff]
    %v2426 = vld [vmem:[#allocation2 + $0x88] sm:$0xff]
    %v2427 = vld [vmem:[#allocation2 + $0x90] sm:$0xff]
    %v2428 = vld [vmem:[#allocation2 + $0x98] sm:$0xff]
    %v2429 = vld [vmem:[#allocation2 + $0xa0] sm:$0xff]
    %v2430 = vld [vmem:[#allocation2 + $0xa8] sm:$0xff]
    %v2431 = vld [vmem:[#allocation2 + $0xb0] sm:$0xff]
    %v2432 = vld [vmem:[#allocation2 + $0xb8] sm:$0xff]
    %v2433 = vld [vmem:[#allocation2 + $0xc0] sm:$0xff]
    %v2434 = vld [vmem:[#allocation2 + $0xc8] sm:$0xff]
    %v2435 = vld [vmem:[#allocation2 + $0xd0] sm:$0xff]
    %v2436 = vld [vmem:[#allocation2 + $0xd8] sm:$0xff]
    %v2437 = vld [vmem:[#allocation2 + $0xe0] sm:$0xff]
    %v2438 = vld [vmem:[#allocation2 + $0xe8] sm:$0xff]
    %v2439 = vld [vmem:[#allocation2 + $0xf0] sm:$0xff]
    %v2440 = vld [vmem:[#allocation2 + $0xf8] sm:$0xff]
    %v2441 = vld [vmem:[#allocation2 + $0x100] sm:$0xff]
    %v2442 = vld [vmem:[#allocation2 + $0x108] sm:$0xff]
    %v2443 = vld [vmem:[#allocation2 + $0x110] sm:$0xff]
    %v2444 = vld [vmem:[#allocation2 + $0x118] sm:$0xff]
    %v2445 = vld [vmem:[#allocation2 + $0x120] sm:$0xff]
    %v2446 = vld [vmem:[#allocation2 + $0x128] sm:$0xff]
    %v2447 = vld [vmem:[#allocation2 + $0x130] sm:$0xff]
    %v2448 = vld [vmem:[#allocation2 + $0x138] sm:$0xff]
    %v2449 = vld [vmem:[#allocation2 + $0x140] sm:$0xff]
    %v2450 = vld [vmem:[#allocation2 + $0x148] sm:$0xff]
    %v2451 = vld [vmem:[#allocation2 + $0x150] sm:$0xff]
    %v2452 = vld [vmem:[#allocation2 + $0x158] sm:$0xff]
    %v2453 = vld [vmem:[#allocation2 + $0x160] sm:$0xff]
    %v2454 = vld [vmem:[#allocation2 + $0x168] sm:$0xff]
    %v2455 = vld [vmem:[#allocation2 + $0x170] sm:$0xff]
    %v2456 = vld [vmem:[#allocation2 + $0x178] sm:$0xff]
    %v2457 = vld [vmem:[#allocation2 + $0x180] sm:$0xff]
    %v2458 = vld [vmem:[#allocation2 + $0x188] sm:$0xff]
    %v2459 = vld [vmem:[#allocation2 + $0x190] sm:$0xff]
    %v2460 = vld [vmem:[#allocation2 + $0x198] sm:$0xff]
    %v2461 = vld [vmem:[#allocation2 + $0x1a0] sm:$0xff]
    %v2462 = vld [vmem:[#allocation2 + $0x1a8] sm:$0xff]
    %v2463 = vld [vmem:[#allocation2 + $0x1b0] sm:$0xff]
    %v2464 = vld [vmem:[#allocation2 + $0x1b8] sm:$0xff]
    %v2465 = vld [vmem:[#allocation2 + $0x1c0] sm:$0xff]
    %v2466 = vld [vmem:[#allocation2 + $0x1c8] sm:$0xff]
    %v2467 = vld [vmem:[#allocation2 + $0x1d0] sm:$0xff]
    %v2468 = vld [vmem:[#allocation2 + $0x1d8] sm:$0xff]
    %v2469 = vld [vmem:[#allocation2 + $0x1e0] sm:$0xff]
    %v2470 = vld [vmem:[#allocation2 + $0x1e8] sm:$0xff]
    %v2471 = vld [vmem:[#allocation2 + $0x1f0] sm:$0xff]
    %v2472 = vld [vmem:[#allocation2 + $0x1f8] sm:$0xff]
    %2473 = vst [vmem:[#allocation9] sm:$0xff] %v2409
    %2474 = vst [vmem:[#allocation9 + $0x8] sm:$0xff] %v2410
    %2475 = vst [vmem:[#allocation9 + $0x10] sm:$0xff] %v2411
    %2476 = vst [vmem:[#allocation9 + $0x18] sm:$0xff] %v2412
    %2477 = vst [vmem:[#allocation9 + $0x20] sm:$0xff] %v2413
    %2478 = vst [vmem:[#allocation9 + $0x28] sm:$0xff] %v2414
    %2479 = vst [vmem:[#allocation9 + $0x30] sm:$0xff] %v2415
    %2480 = vst [vmem:[#allocation9 + $0x38] sm:$0xff] %v2416
    %2481 = vst [vmem:[#allocation9 + $0x40] sm:$0xff] %v2417
    %2482 = vst [vmem:[#allocation9 + $0x48] sm:$0xff] %v2418
    %2483 = vst [vmem:[#allocation9 + $0x50] sm:$0xff] %v2419
    %2484 = vst [vmem:[#allocation9 + $0x58] sm:$0xff] %v2420
    %2485 = vst [vmem:[#allocation9 + $0x60] sm:$0xff] %v2421
    %2486 = vst [vmem:[#allocation9 + $0x68] sm:$0xff] %v2422
    %2487 = vst [vmem:[#allocation9 + $0x70] sm:$0xff] %v2423
    %2488 = vst [vmem:[#allocation9 + $0x78] sm:$0xff] %v2424
    %2489 = vst [vmem:[#allocation9 + $0x80] sm:$0xff] %v2425
    %2490 = vst [vmem:[#allocation9 + $0x88] sm:$0xff] %v2426
    %2491 = vst [vmem:[#allocation9 + $0x90] sm:$0xff] %v2427
    %2492 = vst [vmem:[#allocation9 + $0x98] sm:$0xff] %v2428
    %2493 = vst [vmem:[#allocation9 + $0xa0] sm:$0xff] %v2429
    %2494 = vst [vmem:[#allocation9 + $0xa8] sm:$0xff] %v2430
    %2495 = vst [vmem:[#allocation9 + $0xb0] sm:$0xff] %v2431
    %2496 = vst [vmem:[#allocation9 + $0xb8] sm:$0xff] %v2432
    %2497 = vst [vmem:[#allocation9 + $0xc0] sm:$0xff] %v2433
    %2498 = vst [vmem:[#allocation9 + $0xc8] sm:$0xff] %v2434
    %2499 = vst [vmem:[#allocation9 + $0xd0] sm:$0xff] %v2435
    %2500 = vst [vmem:[#allocation9 + $0xd8] sm:$0xff] %v2436
    %2501 = vst [vmem:[#allocation9 + $0xe0] sm:$0xff] %v2437
    %2502 = vst [vmem:[#allocation9 + $0xe8] sm:$0xff] %v2438
    %2503 = vst [vmem:[#allocation9 + $0xf0] sm:$0xff] %v2439
    %2504 = vst [vmem:[#allocation9 + $0xf8] sm:$0xff] %v2440
    %2505 = vst [vmem:[#allocation9 + $0x100] sm:$0xff] %v2441
    %2506 = vst [vmem:[#allocation9 + $0x108] sm:$0xff] %v2442
    %2507 = vst [vmem:[#allocation9 + $0x110] sm:$0xff] %v2443
    %2508 = vst [vmem:[#allocation9 + $0x118] sm:$0xff] %v2444
    %2509 = vst [vmem:[#allocation9 + $0x120] sm:$0xff] %v2445
    %2510 = vst [vmem:[#allocation9 + $0x128] sm:$0xff] %v2446
    %2511 = vst [vmem:[#allocation9 + $0x130] sm:$0xff] %v2447
    %2512 = vst [vmem:[#allocation9 + $0x138] sm:$0xff] %v2448
    %2513 = vst [vmem:[#allocation9 + $0x140] sm:$0xff] %v2449
    %2514 = vst [vmem:[#allocation9 + $0x148] sm:$0xff] %v2450
    %2515 = vst [vmem:[#allocation9 + $0x150] sm:$0xff] %v2451
    %2516 = vst [vmem:[#allocation9 + $0x158] sm:$0xff] %v2452
    %2517 = vst [vmem:[#allocation9 + $0x160] sm:$0xff] %v2453
    %2518 = vst [vmem:[#allocation9 + $0x168] sm:$0xff] %v2454
    %2519 = vst [vmem:[#allocation9 + $0x170] sm:$0xff] %v2455
    %2520 = vst [vmem:[#allocation9 + $0x178] sm:$0xff] %v2456
    %2521 = vst [vmem:[#allocation9 + $0x180] sm:$0xff] %v2457
    %2522 = vst [vmem:[#allocation9 + $0x188] sm:$0xff] %v2458
    %2523 = vst [vmem:[#allocation9 + $0x190] sm:$0xff] %v2459
    %2524 = vst [vmem:[#allocation9 + $0x198] sm:$0xff] %v2460
    %2525 = vst [vmem:[#allocation9 + $0x1a0] sm:$0xff] %v2461
    %2526 = vst [vmem:[#allocation9 + $0x1a8] sm:$0xff] %v2462
    %2527 = vst [vmem:[#allocation9 + $0x1b0] sm:$0xff] %v2463
    %2528 = vst [vmem:[#allocation9 + $0x1b8] sm:$0xff] %v2464
    %2529 = vst [vmem:[#allocation9 + $0x1c0] sm:$0xff] %v2465
    %2530 = vst [vmem:[#allocation9 + $0x1c8] sm:$0xff] %v2466
    %2531 = vst [vmem:[#allocation9 + $0x1d0] sm:$0xff] %v2467
    %2532 = vst [vmem:[#allocation9 + $0x1d8] sm:$0xff] %v2468
    %2533 = vst [vmem:[#allocation9 + $0x1e0] sm:$0xff] %v2469
    %2534 = vst [vmem:[#allocation9 + $0x1e8] sm:$0xff] %v2470
    %2535 = vst [vmem:[#allocation9 + $0x1f0] sm:$0xff] %v2471
    %2536 = vst [vmem:[#allocation9 + $0x1f8] sm:$0xff] %v2472
    // Predicated region
    $region30: #{tpu_custom_call.1} parent=1 // pred_check
      _
    $region31: #{tpu_custom_call.1} parent=1 // pred_check_branch
      %2538 = sbr.rel (0) target = $region33
    $region32: #{tpu_custom_call.1} parent=1 // pred_region
      %s2540 = ssub.s32 8192, 8192
      %2541 = vsyncadd [#allocation5], %s2540
      %s2542 = sshll.u32 [#allocation9], 4
      %s2543 = int_to_ptr.vmem [resolvable:$true] %s2542
      %2548 = dma.vmem_to_hbm [thread:$0]  %s2543, 8192, %s4, [#allocation5], 128, 128, 8
    $region33: #{tpu_custom_call.1} parent=1 // pred_fallthru
      _
    // Predicated region
    $region34: #{tpu_custom_call.1} parent=1 // pred_check
      _
    $region35: #{tpu_custom_call.1} parent=1 // pred_check_branch
      %2550 = sbr.rel (0) target = $region37
    $region36: #{tpu_custom_call.1} parent=1 // pred_region
      %2551 = dma.done [#allocation5], 8192
    $region37: #{tpu_custom_call.1} parent=1 // pred_fallthru
      _
    %2552 = vsyncpa [#allocation4], 1
    %2553 = vsyncpa [#allocation7], 1
    %2554 = vsyncpa [#allocation5], 1

</llo_original>
